<compile_context>
chip_gen: v5e
topology: v5e:2x2
jax: 0.10.0
libtpu: 0.0.40
codegen_flags: <defaults>
</compile_context>

<pallas_src>
import math

import numpy as np
import jax
import jax.numpy as jnp
from jax import lax
from jax.experimental import pallas as pl
from jax.experimental.pallas import tpu as pltpu


def _pe_kernel(x_ref, a_ref, phase_ref, out_ref):
    """One block.

    x_ref:     (TR, fold*D)          -- `fold` points per row, D coords each
    a_ref:     (fold*D, fold*2*D*O)  -- constant; a[i, L] = 2**(start+o)*pi if
                                        output lane L reads input lane i, else 0
    phase_ref: (1, fold*2*D*O)       -- 0 for sin lanes, pi/2 for cos lanes
    out_ref:   (TR, fold*2*D*O)      -- lane L = p*(2DO) + h*(DO) + d*O + o
    """
    x = x_ref[...].astype(jnp.float32)
    # Lane expansion + octave multiplier on the MXU (HIGHEST => full f32
    # accuracy; high octaves multiply by up to 2**(start+O-1)*pi so a bf16
    # pass would be catastrophically wrong inside sin()).
    ang = jnp.dot(
        x, a_ref[...],
        preferred_element_type=jnp.float32,
        precision=lax.Precision.HIGHEST,
    )
    # cos(x) == sin(x + pi/2): one transcendental per output element.
    out_ref[...] = jnp.sin(ang + phase_ref[...]).astype(out_ref.dtype)


def _expansion_constants(dim, num_octaves, start_octave, fold):
    """Build the constant expansion matrix and phase row (compile-time)."""
    O = num_octaves
    W = 2 * dim * O               # per-point output width
    KD = fold * dim               # input lanes per kernel row
    LW = fold * W                 # output lanes per kernel row (mult of 128)
    lane = np.arange(LW)
    p = lane // W                         # folded point index
    h = (lane % W) // (dim * O)           # 0 -> sin half, 1 -> cos half
    d = (lane % (dim * O)) // O           # coordinate dim
    o = lane % O                          # octave
    mult = np.float32(math.pi) * np.exp2(
        np.float32(start_octave) + o.astype(np.float32))
    a = np.zeros((KD, LW), np.float32)
    a[p * dim + d, lane] = mult
    phase = (h.astype(np.float32) * np.float32(0.5 * math.pi)).reshape(1, LW)
    return jnp.asarray(a), jnp.asarray(phase)


def positional_encoding(coords, num_octaves=8, start_octave=0, block_rows=2048):
    """JAX/Pallas equivalent of PositionalEncoding.forward."""
    coords = jnp.asarray(coords)
    B, N, D = coords.shape
    O = num_octaves
    W = 2 * D * O
    T = B * N

    # Fold enough points per kernel row that the output row width is a
    # multiple of 128 lanes (dense vst) -- e.g. D=3, O=8 -> fold=8, 384 lanes.
    fold = 128 // math.gcd(W, 128)
    T_pad = -(-T // fold) * fold
    R = T_pad // fold
    KD = fold * D
    LW = fold * W

    xf = coords.reshape(T, D)
    if T_pad != T:                                   # rare: pad a few points
        xf = jnp.pad(xf, ((0, T_pad - T), (0, 0)))
    x2 = xf.reshape(R, KD)                           # contiguous, free reshape

    a_const, phase_const = _expansion_constants(D, O, start_octave, fold)

    # Row tile: whole array if small, otherwise a multiple of 8 sublanes.
    tr = R if R <= block_rows else max(8, (block_rows // 8) * 8)
    grid = (pl.cdiv(R, tr),)

    itemsize = jnp.dtype(coords.dtype).itemsize
    cost = pl.CostEstimate(
        flops=2 * R * KD * LW,
        transcendentals=R * LW,
        bytes_accessed=R * KD * itemsize + R * LW * itemsize
        + (KD * LW + LW) * 4,
    )

    out2 = pl.pallas_call(
        _pe_kernel,
        out_shape=jax.ShapeDtypeStruct((R, LW), coords.dtype),
        grid_spec=pltpu.PrefetchScalarGridSpec(
            num_scalar_prefetch=0,
            grid=grid,
            in_specs=[
                pl.BlockSpec((tr, KD), lambda i: (i, 0)),    # coord rows
                pl.BlockSpec((KD, LW), lambda i: (0, 0)),    # selection * mult
                pl.BlockSpec((1, LW), lambda i: (0, 0)),     # sin/cos phase
            ],
            out_specs=pl.BlockSpec((tr, LW), lambda i: (i, 0)),
        ),
        compiler_params=pltpu.CompilerParams(
            dimension_semantics=("parallel",),
        ),
        cost_estimate=cost,
    )(x2, a_const, phase_const)

    out = out2.reshape(T_pad, W)
    if T_pad != T:
        out = out[:T]
    return out.reshape(B, N, W)


def _reference(coords, num_octaves=8, start_octave=0):
    """Pure-JAX reference matching the PyTorch forward (f32 math)."""
    B, N, D = coords.shape
    octaves = jnp.arange(start_octave, start_octave + num_octaves,
                         dtype=jnp.float32)
    multipliers = (2.0 ** octaves) * math.pi
    scaled = coords.astype(jnp.float32)[..., None] * multipliers
    sines = jnp.sin(scaled).reshape(B, N, D * num_octaves)
    cosines = jnp.cos(scaled).reshape(B, N, D * num_octaves)
    return jnp.concatenate((sines, cosines), -1).astype(coords.dtype)


if __name__ == "__main__":
    key = jax.random.PRNGKey(0)
    k1, k2, k3 = jax.random.split(key, 3)

    def check(coords, num_octaves, start_octave, block_rows=2048, tol=1e-3):
        out = positional_encoding(coords, num_octaves, start_octave, block_rows)
        out = jax.block_until_ready(out)
        ref = _reference(coords, num_octaves, start_octave)
        B, N, D = coords.shape
        assert out.shape == (B, N, 2 * D * num_octaves), out.shape
        err = float(jnp.max(jnp.abs(out - ref)))
        assert err < tol, f"max abs err {err}"

    # batch=2, num_points=64, dim=3 (B*N divisible by the fold factor).
    check(jax.random.uniform(k1, (2, 64, 3), jnp.float32, -1.0, 1.0), 8, 0)
    # Padding path: B*N = 255 not divisible by fold; nonzero start_octave.
    check(jax.random.uniform(k2, (3, 85, 3), jnp.float32, -1.0, 1.0), 8, 1)
    # Multi-step grid with a partial trailing block (tiny block_rows).
    check(jax.random.uniform(k3, (2, 100, 3), jnp.float32, -1.0, 1.0), 8, 0,
          block_rows=8)

    print("KERNEL_OK")
</pallas_src>

<mosaic_0001>
module attributes {stable_mosaic.version = 11 : i64} {
  func.func @_pe_kernel(%arg0: i32, %arg1: memref<16x24xf32, #tpu.memory_space<vmem>>, %arg2: memref<24x384xf32, #tpu.memory_space<vmem>>, %arg3: memref<1x384xf32, #tpu.memory_space<vmem>>, %arg4: memref<16x384xf32, #tpu.memory_space<vmem>>) attributes {dimension_semantics = [#tpu.dimension_semantics<parallel>], iteration_bounds = array<i64: 1>, scalar_prefetch = 0 : i64, scratch_operands = 0 : i64, tpu.core_type = #tpu.core_type<tc>, window_params = [{transform_indices = @transform_0, window_bounds = array<i64: 16, 24>}, {pipeline_mode = #tpu.pipeline_mode<synchronous>, transform_indices = @transform_1, window_bounds = array<i64: 24, 384>}, {pipeline_mode = #tpu.pipeline_mode<synchronous>, transform_indices = @transform_2, window_bounds = array<i64: 1, 384>}, {transform_indices = @transform_3, window_bounds = array<i64: 16, 384>}]} {
    %c0 = arith.constant 0 : index
    %c0_0 = arith.constant 0 : index
    %0 = vector.load %arg1[%c0, %c0_0] : memref<16x24xf32, #tpu.memory_space<vmem>>, vector<16x24xf32>
    %c0_1 = arith.constant 0 : index
    %c0_2 = arith.constant 0 : index
    %1 = vector.load %arg2[%c0_1, %c0_2] : memref<24x384xf32, #tpu.memory_space<vmem>>, vector<24x384xf32>
    %cst = arith.constant dense<0.000000e+00> : vector<16x384xf32>
    %2 = tpu.matmul %0, %1, %cst {dimension_numbers = #tpu.dot_dimension_numbers<[1], [0], [0], [1], [0, 0, 1, 1], [], []>, precision = #tpu.contract_precision<fp32>} : vector<16x24xf32>, vector<24x384xf32>, vector<16x384xf32> -> vector<16x384xf32>
    %c0_3 = arith.constant 0 : index
    %c0_4 = arith.constant 0 : index
    %3 = vector.load %arg3[%c0_3, %c0_4] : memref<1x384xf32, #tpu.memory_space<vmem>>, vector<1x384xf32>
    %4 = vector.broadcast %3 : vector<1x384xf32> to vector<16x384xf32>
    %5 = arith.addf %2, %4 : vector<16x384xf32>
    %6 = math.sin %5 : vector<16x384xf32>
    %c0_5 = arith.constant 0 : index
    %c0_6 = arith.constant 0 : index
    %7 = vector.load %arg4[%c0_5, %c0_6] : memref<16x384xf32, #tpu.memory_space<vmem>>, vector<16x384xf32>
    tpu.vector_store %arg4[%c0_5, %c0_6], %6 {strides = array<i32>} : memref<16x384xf32, #tpu.memory_space<vmem>>, vector<16x384xf32>,
    return
  }
  func.func @transform_0(%arg0: i32) -> (i32, i32) {
    %c0_i32 = arith.constant 0 : i32
    %c0_i32_0 = arith.constant 0 : i32
    return %arg0, %c0_i32 : i32, i32
  }
  func.func @transform_1(%arg0: i32) -> (i32, i32) {
    %c0_i32 = arith.constant 0 : i32
    %c0_i32_0 = arith.constant 0 : i32
    %c0_i32_1 = arith.constant 0 : i32
    return %c0_i32, %c0_i32_0 : i32, i32
  }
  func.func @transform_2(%arg0: i32) -> (i32, i32) {
    %c0_i32 = arith.constant 0 : i32
    %c0_i32_0 = arith.constant 0 : i32
    %c0_i32_1 = arith.constant 0 : i32
    return %c0_i32, %c0_i32_0 : i32, i32
  }
  func.func @transform_3(%arg0: i32) -> (i32, i32) {
    %c0_i32 = arith.constant 0 : i32
    %c0_i32_0 = arith.constant 0 : i32
    return %arg0, %c0_i32 : i32, i32
  }
}

</mosaic_0001>

<llo_original>
// kernel: tpu_custom_call.1
$region0: #{tpu_custom_call.1}
  #allocation0 [shape = 'u32[]', space=smem, size = 0x4, offset = 0x4, fixed_abs, tag = 'smem constant byte address 0x4 - core index']
  #allocation1 [shape = 'u32[72,128]{1,0:T(1,128)}', space=vmem, size = 0x9000, scoped, tag = 'internal scratch']
  %s0 = inlined_call_operand.hbm [shape: f32[16,24], index: 0, kind: input, shape index: {}]
  %s1 = inlined_call_operand.hbm [shape: f32[24,384], index: 1, kind: input, shape index: {}]
  %s2 = inlined_call_operand.hbm [shape: f32[1,384], index: 2, kind: input, shape index: {}]
  %s3 = inlined_call_operand.hbm [shape: f32[16,384], index: 3, kind: output, shape index: {}]
  %s4 = sld [smem:[#allocation0]]
  $region34: #{tpu_custom_call.1} parent=0
    _
  %s6 = ssub.s32 1, %s4
  %s7 = scalar_select 0, %s6, %s4
  $region1: #{tpu_custom_call.1} parent=0
    #allocation2 [shape = 'u8[8192]{0}', space=vmem, size = 0x2000, scoped, tag = 'input window, operand 0, single buffered']
    #allocation3 [shape = 's32[1]{0}', space=sflag, size = 0x4, scoped, tag = 'scoped memory for tpu_custom_call.1']
    #allocation4 [shape = 's32[1]{0}', space=sflag, size = 0x4, scoped, tag = 'scoped memory for tpu_custom_call.1']
    #allocation5 [shape = 'u8[36864]{0}', space=vmem, size = 0x9000, scoped, tag = 'input window, operand 1, single buffered']
    #allocation6 [shape = 's32[1]{0}', space=sflag, size = 0x4, scoped, tag = 'scoped memory for tpu_custom_call.1']
    #allocation7 [shape = 'u8[1536]{0}', space=vmem, size = 0x800, scoped, tag = 'input window, operand 2, single buffered']
    #allocation8 [shape = 'u8[24576]{0}', space=vmem, size = 0x6000, scoped, tag = 'output window, operand 0, single buffered']
    %8 = vsyncpa [#allocation3], 0
    %9 = vsyncpa [#allocation6], 0
    %10 = vsyncpa [#allocation4], 0
    // Predicated region
    $region2: #{tpu_custom_call.1} parent=1 // pred_check
      _
    $region3: #{tpu_custom_call.1} parent=1 // pred_check_branch
      %12 = sbr.rel (0) target = $region5
    $region4: #{tpu_custom_call.1} parent=1 // pred_region
      %14 = vsyncadd [#allocation3], 0
      %s15 = sshll.u32 %s0, 4
      %s16 = int_to_ptr.hbm [resolvable:$true] %s15
      %s17 = sshll.u32 [#allocation2], 4
      %s18 = int_to_ptr.vmem [resolvable:$true] %s17
      %23 = dma.hbm_to_vmem [thread:$0]  %s16, 256, %s18, [#allocation3], 128, 128, 8
    $region5: #{tpu_custom_call.1} parent=1 // pred_fallthru
      _
    // Predicated region
    $region6: #{tpu_custom_call.1} parent=1 // pred_check
      _
    $region7: #{tpu_custom_call.1} parent=1 // pred_check_branch
      %25 = sbr.rel (0) target = $region9
    $region8: #{tpu_custom_call.1} parent=1 // pred_region
      %27 = vsyncadd [#allocation6], 0
      %s28 = sshll.u32 %s1, 4
      %s29 = int_to_ptr.hbm [resolvable:$true] %s28
      %s30 = sshll.u32 [#allocation5], 4
      %s31 = int_to_ptr.vmem [resolvable:$true] %s30
      %36 = dma.hbm_to_vmem [thread:$0]  %s29, 1152, %s31, [#allocation6], 384, 384, 24
    $region9: #{tpu_custom_call.1} parent=1 // pred_fallthru
      _
    // Predicated region
    $region10: #{tpu_custom_call.1} parent=1 // pred_check
      _
    $region11: #{tpu_custom_call.1} parent=1 // pred_check_branch
      %38 = sbr.rel (0) target = $region13
    $region12: #{tpu_custom_call.1} parent=1 // pred_region
      %40 = vsyncadd [#allocation6], 0
      %s42 = sshll.u32 %s2, 4
      %s43 = int_to_ptr.hbm [resolvable:$true] %s42
      %s44 = sshll.u32 [#allocation7], 4
      %s45 = int_to_ptr.vmem [resolvable:$true] %s44
      %47 = dma.hbm_to_vmem [thread:$0]  %s43, 48, %s45, [#allocation6]
    $region13: #{tpu_custom_call.1} parent=1 // pred_fallthru
      _
    // Predicated region
    $region14: #{tpu_custom_call.1} parent=1 // pred_check
      _
    $region15: #{tpu_custom_call.1} parent=1 // pred_check_branch
      %49 = sbr.rel (0) target = $region17
    $region16: #{tpu_custom_call.1} parent=1 // pred_region
      %51 = dma.done [#allocation3], 256
    $region17: #{tpu_custom_call.1} parent=1 // pred_fallthru
      _
    // Predicated region
    $region18: #{tpu_custom_call.1} parent=1 // pred_check
      _
    $region19: #{tpu_custom_call.1} parent=1 // pred_check_branch
      %53 = sbr.rel (0) target = $region21
    $region20: #{tpu_custom_call.1} parent=1 // pred_region
      %55 = dma.done [#allocation6], 1152
    $region21: #{tpu_custom_call.1} parent=1 // pred_fallthru
      _
    // Predicated region
    $region22: #{tpu_custom_call.1} parent=1 // pred_check
      _
    $region23: #{tpu_custom_call.1} parent=1 // pred_check_branch
      %57 = sbr.rel (0) target = $region25
    $region24: #{tpu_custom_call.1} parent=1 // pred_region
      %59 = dma.done [#allocation6], 48
    $region25: #{tpu_custom_call.1} parent=1 // pred_fallthru
      _
    %v60 = vld [vmem:[#allocation2] sm:$0xff]
    %v61 = vld [vmem:[#allocation2 + $0x8] sm:$0xff]
    %v62 = vld [vmem:[#allocation5] sm:$0xff]
    %v63 = vld [vmem:[#allocation5 + $0x8] sm:$0xff]
    %v64 = vld [vmem:[#allocation5 + $0x10] sm:$0xff]
    %v65 = vld [vmem:[#allocation5 + $0x18] sm:$0xff]
    %v66 = vld [vmem:[#allocation5 + $0x20] sm:$0xff]
    %v67 = vld [vmem:[#allocation5 + $0x28] sm:$0xff]
    %v68 = vld [vmem:[#allocation5 + $0x30] sm:$0xff]
    %v69 = vld [vmem:[#allocation5 + $0x38] sm:$0xff]
    %v70 = vld [vmem:[#allocation5 + $0x40] sm:$0xff]
    %v71 = vld [vmem:[#allocation7] sm:$0x7]
    %v73 = vperm.slane %v71, 0
    %v74 = vperm.slane %v71, 1
    %v75 = vperm.slane %v71, 2
    %vm79 = vcmask 195584
    %v81 = vsel %vm79, %v60, 0
    %v84 = vsel %vm79, %v61, 0
    %86 = vmatpush.msra.mxu0 0.0
    %87 = vmatpush.msra.mxu0 0.0
    %88 = vmatpush.msra.mxu0 0.0
    %89 = vmatpush.msra.mxu0 0.0
    %90 = vmatpush.msra.mxu0 0.0
    %91 = vmatpush.msra.mxu0 0.0
    %92 = vmatpush.msra.mxu0 0.0
    %93 = vmatpush.msra.mxu0 0.0
    %94 = vmatpush.msra.mxu0 0.0
    %95 = vmatpush.msra.mxu0 0.0
    %96 = vmatpush.msra.mxu0 0.0
    %97 = vmatpush.msra.mxu0 0.0
    %98 = vmatpush.msra.mxu0 0.0
    %v99 = vand.u32 %v68, 4294901760
    %100 = vmatpush.msra.mxu0 %v99
    %v101 = vand.u32 %v65, 4294901760
    %102 = vmatpush.msra.mxu0 %v101
    %v103 = vand.u32 %v62, 4294901760
    %104 = vmatpush.msra.mxu0 %v103
    %v105 = vand.u32 %v81, 4294901760
    %v106 = vsub.f32 %v81, %v105
    %v107 = vand.u32 %v106, 4294901760
    %v108 = vsub.f32 %v106, %v107
    %v109 = vand.u32 %v108, 4294901760
    %110 = vmatmul.f32.gmra.mxu0 %v109
    %v111 = vpop.f32.mrf.mxu0
    %v112 = vadd.f32 %v73, %v111
    %v113 = vand.u32 %v84, 4294901760
    %v114 = vsub.f32 %v84, %v113
    %v115 = vand.u32 %v114, 4294901760
    %v116 = vsub.f32 %v114, %v115
    %v117 = vand.u32 %v116, 4294901760
    %118 = vmatmul.f32.gmra.mxu0 %v117
    %v119 = vpop.f32.mrf.mxu0
    %v120 = vadd.f32 %v73, %v119
    %121 = vdwg.mxu0
    %122 = vmatpush.msra.mxu0 0.0
    %123 = vmatpush.msra.mxu0 0.0
    %124 = vmatpush.msra.mxu0 0.0
    %125 = vmatpush.msra.mxu0 0.0
    %126 = vmatpush.msra.mxu0 0.0
    %127 = vmatpush.msra.mxu0 0.0
    %128 = vmatpush.msra.mxu0 0.0
    %129 = vmatpush.msra.mxu0 0.0
    %130 = vmatpush.msra.mxu0 0.0
    %131 = vmatpush.msra.mxu0 0.0
    %132 = vmatpush.msra.mxu0 0.0
    %133 = vmatpush.msra.mxu0 0.0
    %134 = vmatpush.msra.mxu0 0.0
    %v135 = vand.u32 %v68, 4294901760
    %v136 = vsub.f32 %v68, %v135
    %v137 = vand.u32 %v136, 4294901760
    %v138 = vsub.f32 %v136, %v137
    %v139 = vand.u32 %v138, 4294901760
    %140 = vmatpush.msra.mxu0 %v139
    %v141 = vand.u32 %v65, 4294901760
    %v142 = vsub.f32 %v65, %v141
    %v143 = vand.u32 %v142, 4294901760
    %v144 = vsub.f32 %v142, %v143
    %v145 = vand.u32 %v144, 4294901760
    %146 = vmatpush.msra.mxu0 %v145
    %v147 = vand.u32 %v62, 4294901760
    %v148 = vsub.f32 %v62, %v147
    %v149 = vand.u32 %v148, 4294901760
    %v150 = vsub.f32 %v148, %v149
    %v151 = vand.u32 %v150, 4294901760
    %152 = vmatpush.msra.mxu0 %v151
    %v153 = vand.u32 %v81, 4294901760
    %154 = vmatmul.f32.gmra.mxu0 %v153
    %v155 = vpop.f32.mrf.mxu0
    %v156 = vadd.f32 %v112, %v155
    %v157 = vand.u32 %v84, 4294901760
    %158 = vmatmul.f32.gmra.mxu0 %v157
    %v159 = vpop.f32.mrf.mxu0
    %v160 = vadd.f32 %v120, %v159
    %161 = vdwg.mxu0
    %162 = vmatpush.msra.mxu0 0.0
    %163 = vmatpush.msra.mxu0 0.0
    %164 = vmatpush.msra.mxu0 0.0
    %165 = vmatpush.msra.mxu0 0.0
    %166 = vmatpush.msra.mxu0 0.0
    %167 = vmatpush.msra.mxu0 0.0
    %168 = vmatpush.msra.mxu0 0.0
    %169 = vmatpush.msra.mxu0 0.0
    %170 = vmatpush.msra.mxu0 0.0
    %171 = vmatpush.msra.mxu0 0.0
    %172 = vmatpush.msra.mxu0 0.0
    %173 = vmatpush.msra.mxu0 0.0
    %174 = vmatpush.msra.mxu0 0.0
    %v175 = vand.u32 %v68, 4294901760
    %v176 = vsub.f32 %v68, %v175
    %177 = vmatpush.msra.mxu0 %v176
    %v178 = vand.u32 %v65, 4294901760
    %v179 = vsub.f32 %v65, %v178
    %180 = vmatpush.msra.mxu0 %v179
    %v181 = vand.u32 %v62, 4294901760
    %v182 = vsub.f32 %v62, %v181
    %183 = vmatpush.msra.mxu0 %v182
    %v184 = vand.u32 %v81, 4294901760
    %v185 = vsub.f32 %v81, %v184
    %186 = vmatmul.f32.gmra.mxu0 %v185
    %v187 = vpop.f32.mrf.mxu0
    %v188 = vadd.f32 %v156, %v187
    %v189 = vand.u32 %v84, 4294901760
    %v190 = vsub.f32 %v84, %v189
    %191 = vmatmul.f32.gmra.mxu0 %v190
    %v192 = vpop.f32.mrf.mxu0
    %v193 = vadd.f32 %v160, %v192
    %194 = vdwg.mxu0
    %195 = vmatpush.msra.mxu0 0.0
    %196 = vmatpush.msra.mxu0 0.0
    %197 = vmatpush.msra.mxu0 0.0
    %198 = vmatpush.msra.mxu0 0.0
    %199 = vmatpush.msra.mxu0 0.0
    %200 = vmatpush.msra.mxu0 0.0
    %201 = vmatpush.msra.mxu0 0.0
    %202 = vmatpush.msra.mxu0 0.0
    %203 = vmatpush.msra.mxu0 0.0
    %204 = vmatpush.msra.mxu0 0.0
    %205 = vmatpush.msra.mxu0 0.0
    %206 = vmatpush.msra.mxu0 0.0
    %207 = vmatpush.msra.mxu0 0.0
    %v208 = vand.u32 %v68, 4294901760
    %209 = vmatpush.msra.mxu0 %v208
    %v210 = vand.u32 %v65, 4294901760
    %211 = vmatpush.msra.mxu0 %v210
    %v212 = vand.u32 %v62, 4294901760
    %213 = vmatpush.msra.mxu0 %v212
    %v214 = vand.u32 %v81, 4294901760
    %v215 = vsub.f32 %v81, %v214
    %v216 = vand.u32 %v215, 4294901760
    %217 = vmatmul.f32.gmra.mxu0 %v216
    %v218 = vpop.f32.mrf.mxu0
    %v219 = vadd.f32 %v188, %v218
    %v220 = vand.u32 %v84, 4294901760
    %v221 = vsub.f32 %v84, %v220
    %v222 = vand.u32 %v221, 4294901760
    %223 = vmatmul.f32.gmra.mxu0 %v222
    %v224 = vpop.f32.mrf.mxu0
    %v225 = vadd.f32 %v193, %v224
    %226 = vdwg.mxu0
    %227 = vmatpush.msra.mxu0 0.0
    %228 = vmatpush.msra.mxu0 0.0
    %229 = vmatpush.msra.mxu0 0.0
    %230 = vmatpush.msra.mxu0 0.0
    %231 = vmatpush.msra.mxu0 0.0
    %232 = vmatpush.msra.mxu0 0.0
    %233 = vmatpush.msra.mxu0 0.0
    %234 = vmatpush.msra.mxu0 0.0
    %235 = vmatpush.msra.mxu0 0.0
    %236 = vmatpush.msra.mxu0 0.0
    %237 = vmatpush.msra.mxu0 0.0
    %238 = vmatpush.msra.mxu0 0.0
    %239 = vmatpush.msra.mxu0 0.0
    %v240 = vand.u32 %v68, 4294901760
    %v241 = vsub.f32 %v68, %v240
    %v242 = vand.u32 %v241, 4294901760
    %243 = vmatpush.msra.mxu0 %v242
    %v244 = vand.u32 %v65, 4294901760
    %v245 = vsub.f32 %v65, %v244
    %v246 = vand.u32 %v245, 4294901760
    %247 = vmatpush.msra.mxu0 %v246
    %v248 = vand.u32 %v62, 4294901760
    %v249 = vsub.f32 %v62, %v248
    %v250 = vand.u32 %v249, 4294901760
    %251 = vmatpush.msra.mxu0 %v250
    %v252 = vand.u32 %v81, 4294901760
    %253 = vmatmul.f32.gmra.mxu0 %v252
    %v254 = vpop.f32.mrf.mxu0
    %v255 = vadd.f32 %v219, %v254
    %v256 = vand.u32 %v84, 4294901760
    %257 = vmatmul.f32.gmra.mxu0 %v256
    %v258 = vpop.f32.mrf.mxu0
    %v259 = vadd.f32 %v225, %v258
    %260 = vdwg.mxu0
    %261 = vmatpush.msra.mxu0 0.0
    %262 = vmatpush.msra.mxu0 0.0
    %263 = vmatpush.msra.mxu0 0.0
    %264 = vmatpush.msra.mxu0 0.0
    %265 = vmatpush.msra.mxu0 0.0
    %266 = vmatpush.msra.mxu0 0.0
    %267 = vmatpush.msra.mxu0 0.0
    %268 = vmatpush.msra.mxu0 0.0
    %269 = vmatpush.msra.mxu0 0.0
    %270 = vmatpush.msra.mxu0 0.0
    %271 = vmatpush.msra.mxu0 0.0
    %272 = vmatpush.msra.mxu0 0.0
    %273 = vmatpush.msra.mxu0 0.0
    %v274 = vand.u32 %v68, 4294901760
    %275 = vmatpush.msra.mxu0 %v274
    %v276 = vand.u32 %v65, 4294901760
    %277 = vmatpush.msra.mxu0 %v276
    %v278 = vand.u32 %v62, 4294901760
    %279 = vmatpush.msra.mxu0 %v278
    %v280 = vand.u32 %v81, 4294901760
    %281 = vmatmul.f32.gmra.mxu0 %v280
    %v282 = vpop.f32.mrf.mxu0
    %v283 = vadd.f32 %v255, %v282
    %v284 = vand.u32 %v84, 4294901760
    %285 = vmatmul.f32.gmra.mxu0 %v284
    %v286 = vpop.f32.mrf.mxu0
    %v287 = vadd.f32 %v259, %v286
    %288 = vdwg.mxu0
    %289 = vmatpush.msra.mxu0 0.0
    %290 = vmatpush.msra.mxu0 0.0
    %291 = vmatpush.msra.mxu0 0.0
    %292 = vmatpush.msra.mxu0 0.0
    %293 = vmatpush.msra.mxu0 0.0
    %294 = vmatpush.msra.mxu0 0.0
    %295 = vmatpush.msra.mxu0 0.0
    %296 = vmatpush.msra.mxu0 0.0
    %297 = vmatpush.msra.mxu0 0.0
    %298 = vmatpush.msra.mxu0 0.0
    %299 = vmatpush.msra.mxu0 0.0
    %300 = vmatpush.msra.mxu0 0.0
    %301 = vmatpush.msra.mxu0 0.0
    %v302 = vand.u32 %v69, 4294901760
    %303 = vmatpush.msra.mxu0 %v302
    %v304 = vand.u32 %v66, 4294901760
    %305 = vmatpush.msra.mxu0 %v304
    %v306 = vand.u32 %v63, 4294901760
    %307 = vmatpush.msra.mxu0 %v306
    %v308 = vand.u32 %v81, 4294901760
    %v309 = vsub.f32 %v81, %v308
    %v310 = vand.u32 %v309, 4294901760
    %v311 = vsub.f32 %v309, %v310
    %v312 = vand.u32 %v311, 4294901760
    %313 = vmatmul.f32.gmra.mxu0 %v312
    %v314 = vpop.f32.mrf.mxu0
    %v315 = vadd.f32 %v74, %v314
    %v316 = vand.u32 %v84, 4294901760
    %v317 = vsub.f32 %v84, %v316
    %v318 = vand.u32 %v317, 4294901760
    %v319 = vsub.f32 %v317, %v318
    %v320 = vand.u32 %v319, 4294901760
    %321 = vmatmul.f32.gmra.mxu0 %v320
    %v322 = vpop.f32.mrf.mxu0
    %v323 = vadd.f32 %v74, %v322
    %324 = vdwg.mxu0
    %325 = vmatpush.msra.mxu0 0.0
    %326 = vmatpush.msra.mxu0 0.0
    %327 = vmatpush.msra.mxu0 0.0
    %328 = vmatpush.msra.mxu0 0.0
    %329 = vmatpush.msra.mxu0 0.0
    %330 = vmatpush.msra.mxu0 0.0
    %331 = vmatpush.msra.mxu0 0.0
    %332 = vmatpush.msra.mxu0 0.0
    %333 = vmatpush.msra.mxu0 0.0
    %334 = vmatpush.msra.mxu0 0.0
    %335 = vmatpush.msra.mxu0 0.0
    %336 = vmatpush.msra.mxu0 0.0
    %337 = vmatpush.msra.mxu0 0.0
    %v338 = vand.u32 %v69, 4294901760
    %v339 = vsub.f32 %v69, %v338
    %v340 = vand.u32 %v339, 4294901760
    %v341 = vsub.f32 %v339, %v340
    %v342 = vand.u32 %v341, 4294901760
    %343 = vmatpush.msra.mxu0 %v342
    %v344 = vand.u32 %v66, 4294901760
    %v345 = vsub.f32 %v66, %v344
    %v346 = vand.u32 %v345, 4294901760
    %v347 = vsub.f32 %v345, %v346
    %v348 = vand.u32 %v347, 4294901760
    %349 = vmatpush.msra.mxu0 %v348
    %v350 = vand.u32 %v63, 4294901760
    %v351 = vsub.f32 %v63, %v350
    %v352 = vand.u32 %v351, 4294901760
    %v353 = vsub.f32 %v351, %v352
    %v354 = vand.u32 %v353, 4294901760
    %355 = vmatpush.msra.mxu0 %v354
    %v356 = vand.u32 %v81, 4294901760
    %357 = vmatmul.f32.gmra.mxu0 %v356
    %v358 = vpop.f32.mrf.mxu0
    %v359 = vadd.f32 %v315, %v358
    %v360 = vand.u32 %v84, 4294901760
    %361 = vmatmul.f32.gmra.mxu0 %v360
    %v362 = vpop.f32.mrf.mxu0
    %v363 = vadd.f32 %v323, %v362
    %364 = vdwg.mxu0
    %365 = vmatpush.msra.mxu0 0.0
    %366 = vmatpush.msra.mxu0 0.0
    %367 = vmatpush.msra.mxu0 0.0
    %368 = vmatpush.msra.mxu0 0.0
    %369 = vmatpush.msra.mxu0 0.0
    %370 = vmatpush.msra.mxu0 0.0
    %371 = vmatpush.msra.mxu0 0.0
    %372 = vmatpush.msra.mxu0 0.0
    %373 = vmatpush.msra.mxu0 0.0
    %374 = vmatpush.msra.mxu0 0.0
    %375 = vmatpush.msra.mxu0 0.0
    %376 = vmatpush.msra.mxu0 0.0
    %377 = vmatpush.msra.mxu0 0.0
    %v378 = vand.u32 %v69, 4294901760
    %v379 = vsub.f32 %v69, %v378
    %380 = vmatpush.msra.mxu0 %v379
    %v381 = vand.u32 %v66, 4294901760
    %v382 = vsub.f32 %v66, %v381
    %383 = vmatpush.msra.mxu0 %v382
    %v384 = vand.u32 %v63, 4294901760
    %v385 = vsub.f32 %v63, %v384
    %386 = vmatpush.msra.mxu0 %v385
    %v387 = vand.u32 %v81, 4294901760
    %v388 = vsub.f32 %v81, %v387
    %389 = vmatmul.f32.gmra.mxu0 %v388
    %v390 = vpop.f32.mrf.mxu0
    %v391 = vadd.f32 %v359, %v390
    %v392 = vand.u32 %v84, 4294901760
    %v393 = vsub.f32 %v84, %v392
    %394 = vmatmul.f32.gmra.mxu0 %v393
    %v395 = vpop.f32.mrf.mxu0
    %v396 = vadd.f32 %v363, %v395
    %397 = vdwg.mxu0
    %398 = vmatpush.msra.mxu0 0.0
    %399 = vmatpush.msra.mxu0 0.0
    %400 = vmatpush.msra.mxu0 0.0
    %401 = vmatpush.msra.mxu0 0.0
    %402 = vmatpush.msra.mxu0 0.0
    %403 = vmatpush.msra.mxu0 0.0
    %404 = vmatpush.msra.mxu0 0.0
    %405 = vmatpush.msra.mxu0 0.0
    %406 = vmatpush.msra.mxu0 0.0
    %407 = vmatpush.msra.mxu0 0.0
    %408 = vmatpush.msra.mxu0 0.0
    %409 = vmatpush.msra.mxu0 0.0
    %410 = vmatpush.msra.mxu0 0.0
    %v411 = vand.u32 %v69, 4294901760
    %412 = vmatpush.msra.mxu0 %v411
    %v413 = vand.u32 %v66, 4294901760
    %414 = vmatpush.msra.mxu0 %v413
    %v415 = vand.u32 %v63, 4294901760
    %416 = vmatpush.msra.mxu0 %v415
    %v417 = vand.u32 %v81, 4294901760
    %v418 = vsub.f32 %v81, %v417
    %v419 = vand.u32 %v418, 4294901760
    %420 = vmatmul.f32.gmra.mxu0 %v419
    %v421 = vpop.f32.mrf.mxu0
    %v422 = vadd.f32 %v391, %v421
    %v423 = vand.u32 %v84, 4294901760
    %v424 = vsub.f32 %v84, %v423
    %v425 = vand.u32 %v424, 4294901760
    %426 = vmatmul.f32.gmra.mxu0 %v425
    %v427 = vpop.f32.mrf.mxu0
    %v428 = vadd.f32 %v396, %v427
    %429 = vdwg.mxu0
    %430 = vmatpush.msra.mxu0 0.0
    %431 = vmatpush.msra.mxu0 0.0
    %432 = vmatpush.msra.mxu0 0.0
    %433 = vmatpush.msra.mxu0 0.0
    %434 = vmatpush.msra.mxu0 0.0
    %435 = vmatpush.msra.mxu0 0.0
    %436 = vmatpush.msra.mxu0 0.0
    %437 = vmatpush.msra.mxu0 0.0
    %438 = vmatpush.msra.mxu0 0.0
    %439 = vmatpush.msra.mxu0 0.0
    %440 = vmatpush.msra.mxu0 0.0
    %441 = vmatpush.msra.mxu0 0.0
    %442 = vmatpush.msra.mxu0 0.0
    %v443 = vand.u32 %v69, 4294901760
    %v444 = vsub.f32 %v69, %v443
    %v445 = vand.u32 %v444, 4294901760
    %446 = vmatpush.msra.mxu0 %v445
    %v447 = vand.u32 %v66, 4294901760
    %v448 = vsub.f32 %v66, %v447
    %v449 = vand.u32 %v448, 4294901760
    %450 = vmatpush.msra.mxu0 %v449
    %v451 = vand.u32 %v63, 4294901760
    %v452 = vsub.f32 %v63, %v451
    %v453 = vand.u32 %v452, 4294901760
    %454 = vmatpush.msra.mxu0 %v453
    %v455 = vand.u32 %v81, 4294901760
    %456 = vmatmul.f32.gmra.mxu0 %v455
    %v457 = vpop.f32.mrf.mxu0
    %v458 = vadd.f32 %v422, %v457
    %v459 = vand.u32 %v84, 4294901760
    %460 = vmatmul.f32.gmra.mxu0 %v459
    %v461 = vpop.f32.mrf.mxu0
    %v462 = vadd.f32 %v428, %v461
    %463 = vdwg.mxu0
    %464 = vmatpush.msra.mxu0 0.0
    %465 = vmatpush.msra.mxu0 0.0
    %466 = vmatpush.msra.mxu0 0.0
    %467 = vmatpush.msra.mxu0 0.0
    %468 = vmatpush.msra.mxu0 0.0
    %469 = vmatpush.msra.mxu0 0.0
    %470 = vmatpush.msra.mxu0 0.0
    %471 = vmatpush.msra.mxu0 0.0
    %472 = vmatpush.msra.mxu0 0.0
    %473 = vmatpush.msra.mxu0 0.0
    %474 = vmatpush.msra.mxu0 0.0
    %475 = vmatpush.msra.mxu0 0.0
    %476 = vmatpush.msra.mxu0 0.0
    %v477 = vand.u32 %v69, 4294901760
    %478 = vmatpush.msra.mxu0 %v477
    %v479 = vand.u32 %v66, 4294901760
    %480 = vmatpush.msra.mxu0 %v479
    %v481 = vand.u32 %v63, 4294901760
    %482 = vmatpush.msra.mxu0 %v481
    %v483 = vand.u32 %v81, 4294901760
    %484 = vmatmul.f32.gmra.mxu0 %v483
    %v485 = vpop.f32.mrf.mxu0
    %v486 = vadd.f32 %v458, %v485
    %v487 = vand.u32 %v84, 4294901760
    %488 = vmatmul.f32.gmra.mxu0 %v487
    %v489 = vpop.f32.mrf.mxu0
    %v490 = vadd.f32 %v462, %v489
    %491 = vdwg.mxu0
    %492 = vmatpush.msra.mxu0 0.0
    %493 = vmatpush.msra.mxu0 0.0
    %494 = vmatpush.msra.mxu0 0.0
    %495 = vmatpush.msra.mxu0 0.0
    %496 = vmatpush.msra.mxu0 0.0
    %497 = vmatpush.msra.mxu0 0.0
    %498 = vmatpush.msra.mxu0 0.0
    %499 = vmatpush.msra.mxu0 0.0
    %500 = vmatpush.msra.mxu0 0.0
    %501 = vmatpush.msra.mxu0 0.0
    %502 = vmatpush.msra.mxu0 0.0
    %503 = vmatpush.msra.mxu0 0.0
    %504 = vmatpush.msra.mxu0 0.0
    %v505 = vand.u32 %v70, 4294901760
    %506 = vmatpush.msra.mxu0 %v505
    %v507 = vand.u32 %v67, 4294901760
    %508 = vmatpush.msra.mxu0 %v507
    %v509 = vand.u32 %v64, 4294901760
    %510 = vmatpush.msra.mxu0 %v509
    %v511 = vand.u32 %v81, 4294901760
    %v512 = vsub.f32 %v81, %v511
    %v513 = vand.u32 %v512, 4294901760
    %v514 = vsub.f32 %v512, %v513
    %v515 = vand.u32 %v514, 4294901760
    %516 = vmatmul.f32.gmra.mxu0 %v515
    %v517 = vpop.f32.mrf.mxu0
    %v518 = vadd.f32 %v75, %v517
    %v519 = vand.u32 %v84, 4294901760
    %v520 = vsub.f32 %v84, %v519
    %v521 = vand.u32 %v520, 4294901760
    %v522 = vsub.f32 %v520, %v521
    %v523 = vand.u32 %v522, 4294901760
    %524 = vmatmul.f32.gmra.mxu0 %v523
    %v525 = vpop.f32.mrf.mxu0
    %v526 = vadd.f32 %v75, %v525
    %527 = vdwg.mxu0
    %528 = vmatpush.msra.mxu0 0.0
    %529 = vmatpush.msra.mxu0 0.0
    %530 = vmatpush.msra.mxu0 0.0
    %531 = vmatpush.msra.mxu0 0.0
    %532 = vmatpush.msra.mxu0 0.0
    %533 = vmatpush.msra.mxu0 0.0
    %534 = vmatpush.msra.mxu0 0.0
    %535 = vmatpush.msra.mxu0 0.0
    %536 = vmatpush.msra.mxu0 0.0
    %537 = vmatpush.msra.mxu0 0.0
    %538 = vmatpush.msra.mxu0 0.0
    %539 = vmatpush.msra.mxu0 0.0
    %540 = vmatpush.msra.mxu0 0.0
    %v541 = vand.u32 %v70, 4294901760
    %v542 = vsub.f32 %v70, %v541
    %v543 = vand.u32 %v542, 4294901760
    %v544 = vsub.f32 %v542, %v543
    %v545 = vand.u32 %v544, 4294901760
    %546 = vmatpush.msra.mxu0 %v545
    %v547 = vand.u32 %v67, 4294901760
    %v548 = vsub.f32 %v67, %v547
    %v549 = vand.u32 %v548, 4294901760
    %v550 = vsub.f32 %v548, %v549
    %v551 = vand.u32 %v550, 4294901760
    %552 = vmatpush.msra.mxu0 %v551
    %v553 = vand.u32 %v64, 4294901760
    %v554 = vsub.f32 %v64, %v553
    %v555 = vand.u32 %v554, 4294901760
    %v556 = vsub.f32 %v554, %v555
    %v557 = vand.u32 %v556, 4294901760
    %558 = vmatpush.msra.mxu0 %v557
    %v559 = vand.u32 %v81, 4294901760
    %560 = vmatmul.f32.gmra.mxu0 %v559
    %v561 = vpop.f32.mrf.mxu0
    %v562 = vadd.f32 %v518, %v561
    %v563 = vand.u32 %v84, 4294901760
    %564 = vmatmul.f32.gmra.mxu0 %v563
    %v565 = vpop.f32.mrf.mxu0
    %v566 = vadd.f32 %v526, %v565
    %567 = vdwg.mxu0
    %568 = vmatpush.msra.mxu0 0.0
    %569 = vmatpush.msra.mxu0 0.0
    %570 = vmatpush.msra.mxu0 0.0
    %571 = vmatpush.msra.mxu0 0.0
    %572 = vmatpush.msra.mxu0 0.0
    %573 = vmatpush.msra.mxu0 0.0
    %574 = vmatpush.msra.mxu0 0.0
    %575 = vmatpush.msra.mxu0 0.0
    %576 = vmatpush.msra.mxu0 0.0
    %577 = vmatpush.msra.mxu0 0.0
    %578 = vmatpush.msra.mxu0 0.0
    %579 = vmatpush.msra.mxu0 0.0
    %580 = vmatpush.msra.mxu0 0.0
    %v581 = vand.u32 %v70, 4294901760
    %v582 = vsub.f32 %v70, %v581
    %583 = vmatpush.msra.mxu0 %v582
    %v584 = vand.u32 %v67, 4294901760
    %v585 = vsub.f32 %v67, %v584
    %586 = vmatpush.msra.mxu0 %v585
    %v587 = vand.u32 %v64, 4294901760
    %v588 = vsub.f32 %v64, %v587
    %589 = vmatpush.msra.mxu0 %v588
    %v590 = vand.u32 %v81, 4294901760
    %v591 = vsub.f32 %v81, %v590
    %592 = vmatmul.f32.gmra.mxu0 %v591
    %v593 = vpop.f32.mrf.mxu0
    %v594 = vadd.f32 %v562, %v593
    %v595 = vand.u32 %v84, 4294901760
    %v596 = vsub.f32 %v84, %v595
    %597 = vmatmul.f32.gmra.mxu0 %v596
    %v598 = vpop.f32.mrf.mxu0
    %v599 = vadd.f32 %v566, %v598
    %600 = vdwg.mxu0
    %601 = vmatpush.msra.mxu0 0.0
    %602 = vmatpush.msra.mxu0 0.0
    %603 = vmatpush.msra.mxu0 0.0
    %604 = vmatpush.msra.mxu0 0.0
    %605 = vmatpush.msra.mxu0 0.0
    %606 = vmatpush.msra.mxu0 0.0
    %607 = vmatpush.msra.mxu0 0.0
    %608 = vmatpush.msra.mxu0 0.0
    %609 = vmatpush.msra.mxu0 0.0
    %610 = vmatpush.msra.mxu0 0.0
    %611 = vmatpush.msra.mxu0 0.0
    %612 = vmatpush.msra.mxu0 0.0
    %613 = vmatpush.msra.mxu0 0.0
    %v614 = vand.u32 %v70, 4294901760
    %615 = vmatpush.msra.mxu0 %v614
    %v616 = vand.u32 %v67, 4294901760
    %617 = vmatpush.msra.mxu0 %v616
    %v618 = vand.u32 %v64, 4294901760
    %619 = vmatpush.msra.mxu0 %v618
    %v620 = vand.u32 %v81, 4294901760
    %v621 = vsub.f32 %v81, %v620
    %v622 = vand.u32 %v621, 4294901760
    %623 = vmatmul.f32.gmra.mxu0 %v622
    %v624 = vpop.f32.mrf.mxu0
    %v625 = vadd.f32 %v594, %v624
    %v626 = vand.u32 %v84, 4294901760
    %v627 = vsub.f32 %v84, %v626
    %v628 = vand.u32 %v627, 4294901760
    %629 = vmatmul.f32.gmra.mxu0 %v628
    %v630 = vpop.f32.mrf.mxu0
    %v631 = vadd.f32 %v599, %v630
    %632 = vdwg.mxu0
    %633 = vmatpush.msra.mxu0 0.0
    %634 = vmatpush.msra.mxu0 0.0
    %635 = vmatpush.msra.mxu0 0.0
    %636 = vmatpush.msra.mxu0 0.0
    %637 = vmatpush.msra.mxu0 0.0
    %638 = vmatpush.msra.mxu0 0.0
    %639 = vmatpush.msra.mxu0 0.0
    %640 = vmatpush.msra.mxu0 0.0
    %641 = vmatpush.msra.mxu0 0.0
    %642 = vmatpush.msra.mxu0 0.0
    %643 = vmatpush.msra.mxu0 0.0
    %644 = vmatpush.msra.mxu0 0.0
    %645 = vmatpush.msra.mxu0 0.0
    %v646 = vand.u32 %v70, 4294901760
    %v647 = vsub.f32 %v70, %v646
    %v648 = vand.u32 %v647, 4294901760
    %649 = vmatpush.msra.mxu0 %v648
    %v650 = vand.u32 %v67, 4294901760
    %v651 = vsub.f32 %v67, %v650
    %v652 = vand.u32 %v651, 4294901760
    %653 = vmatpush.msra.mxu0 %v652
    %v654 = vand.u32 %v64, 4294901760
    %v655 = vsub.f32 %v64, %v654
    %v656 = vand.u32 %v655, 4294901760
    %657 = vmatpush.msra.mxu0 %v656
    %v658 = vand.u32 %v81, 4294901760
    %659 = vmatmul.f32.gmra.mxu0 %v658
    %v660 = vpop.f32.mrf.mxu0
    %v661 = vadd.f32 %v625, %v660
    %v662 = vand.u32 %v84, 4294901760
    %663 = vmatmul.f32.gmra.mxu0 %v662
    %v664 = vpop.f32.mrf.mxu0
    %v665 = vadd.f32 %v631, %v664
    %666 = vdwg.mxu0
    %667 = vmatpush.msra.mxu0 0.0
    %668 = vmatpush.msra.mxu0 0.0
    %669 = vmatpush.msra.mxu0 0.0
    %670 = vmatpush.msra.mxu0 0.0
    %671 = vmatpush.msra.mxu0 0.0
    %672 = vmatpush.msra.mxu0 0.0
    %673 = vmatpush.msra.mxu0 0.0
    %674 = vmatpush.msra.mxu0 0.0
    %675 = vmatpush.msra.mxu0 0.0
    %676 = vmatpush.msra.mxu0 0.0
    %677 = vmatpush.msra.mxu0 0.0
    %678 = vmatpush.msra.mxu0 0.0
    %679 = vmatpush.msra.mxu0 0.0
    %v680 = vand.u32 %v70, 4294901760
    %681 = vmatpush.msra.mxu0 %v680
    %v682 = vand.u32 %v67, 4294901760
    %683 = vmatpush.msra.mxu0 %v682
    %v684 = vand.u32 %v64, 4294901760
    %685 = vmatpush.msra.mxu0 %v684
    %v686 = vand.u32 %v81, 4294901760
    %687 = vmatmul.f32.gmra.mxu0 %v686
    %v688 = vpop.f32.mrf.mxu0
    %v689 = vadd.f32 %v661, %v688
    %v690 = vand.u32 %v84, 4294901760
    %691 = vmatmul.f32.gmra.mxu0 %v690
    %v692 = vpop.f32.mrf.mxu0
    %v693 = vadd.f32 %v665, %v692
    %694 = vdwg.mxu0
    %v695 = vand.u32 2147483647, %v283
    %vm696 = vcmp.le.f32.partialorder %v695, 0.7853982
    %vm697 = vcmp.lt.s32.totalorder %v283, 0
    %v698 = vand.u32 %v283, 2139095040
    %v699 = vshrl.u32 %v698, 23
    %v700 = vsub.s32 %v699, 127
    %v701 = vand.u32 2147483647, %v283
    %v702 = vand.u32 %v701, 8388607
    %v703 = vor.u32 %v702, 8388608
    %v704 = vsub.s32 0, %v703
    %v705 = vadd.s32 %v700, 1
    %vm706 = vcmp.gt.s32.totalorder %v705, 0
    %v707 = vsel %vm706, %v705, 0
    %v708 = vshrl.u32 %v707, 5
    %v709 = vand.u32 %v707, 31
    %v710 = vsub.s32 32, %v709
    %v711 = vshrl.u32 683565275, %v710
    %v712 = vshll.u32 683565275, %v709
    %v713 = vshrl.u32 2475754826, %v710
    %v714 = vor.u32 %v712, %v713
    %v715 = vshll.u32 2475754826, %v709
    %v716 = vshrl.u32 2131351028, %v710
    %v717 = vor.u32 %v715, %v716
    %v718 = vshll.u32 2131351028, %v709
    %v719 = vshrl.u32 2102212464, %v710
    %v720 = vor.u32 %v718, %v719
    %v721 = vshll.u32 2102212464, %v709
    %v722 = vshrl.u32 920167782, %v710
    %v723 = vor.u32 %v721, %v722
    %v724 = vshll.u32 920167782, %v709
    %v725 = vshrl.u32 1326507024, %v710
    %v726 = vor.u32 %v724, %v725
    %vm727 = vcmp.lt.s32.totalorder %v708, 1
    %vm728 = vcmp.lt.s32.totalorder %v708, 2
    %vm729 = vcmp.lt.s32.totalorder %v708, 3
    %vm730 = vcmp.lt.s32.totalorder %v708, 4
    %v731 = vsel %vm727, %v711, %v714
    %v732 = vsel %vm730, %v720, 2102212464
    %v733 = vsel %vm729, %v717, %v732
    %v734 = vsel %vm728, %v731, %v733
    %v735 = vsel %vm727, %v714, %v717
    %v736 = vsel %vm730, %v723, 920167782
    %v737 = vsel %vm729, %v720, %v736
    %v738 = vsel %vm728, %v735, %v737
    %v739 = vsel %vm727, %v717, %v720
    %v740 = vsel %vm730, %v726, 1326507024
    %v741 = vsel %vm729, %v723, %v740
    %v742 = vsel %vm728, %v739, %v741
    %v743 = vshll.u32 %v703, 8
    %v744 = vand.u32 %v743, 65535
    %v745 = vshrl.u32 %v743, 16
    %v746 = vand.u32 %v742, 65535
    %v747 = vshrl.u32 %v742, 16
    %v748 = vmul.u32 %v744, %v746
    %v749 = vmul.u32 %v744, %v747
    %v750 = vmul.u32 %v745, %v746
    %v751 = vmul.u32 %v745, %v747
    %v752 = vshll.u32 %v749, 16
    %v753 = vshrl.u32 %v749, 16
    %v754 = vshll.u32 %v750, 16
    %v755 = vshrl.u32 %v750, 16
    %vm756 = vc.u32 %v748, %v752
    %v757 = vsel %vm756, 1, 0
    %v758 = vadd.s32 %v748, %v752
    %v759 = vadd.s32 %v751, %v757
    %vm760 = vc.u32 %v758, %v754
    %v761 = vsel %vm760, 1, 0
    %v762 = vadd.s32 %v758, %v754
    %v763 = vadd.s32 %v759, %v761
    %v764 = vadd.s32 %v763, %v753
    %v765 = vadd.s32 %v764, %v755
    %v766 = vand.u32 %v743, 65535
    %v767 = vshrl.u32 %v743, 16
    %v768 = vand.u32 %v738, 65535
    %v769 = vshrl.u32 %v738, 16
    %v770 = vmul.u32 %v766, %v768
    %v771 = vmul.u32 %v766, %v769
    %v772 = vmul.u32 %v767, %v768
    %v773 = vmul.u32 %v767, %v769
    %v774 = vshll.u32 %v771, 16
    %v775 = vshrl.u32 %v771, 16
    %v776 = vshll.u32 %v772, 16
    %v777 = vshrl.u32 %v772, 16
    %vm778 = vc.u32 %v770, %v774
    %v779 = vsel %vm778, 1, 0
    %v780 = vadd.s32 %v770, %v774
    %v781 = vadd.s32 %v773, %v779
    %vm782 = vc.u32 %v780, %v776
    %v783 = vsel %vm782, 1, 0
    %v784 = vadd.s32 %v780, %v776
    %v785 = vadd.s32 %v781, %v783
    %v786 = vadd.s32 %v785, %v775
    %v787 = vadd.s32 %v786, %v777
    %v788 = vmul.u32 %v743, %v734
    %v789 = vadd.s32 %v765, %v784
    %vm790 = vc.u32 %v765, %v784
    %v791 = vadd.s32 %v787, 1
    %v792 = vsel %vm790, %v791, %v787
    %v793 = vadd.s32 %v788, %v792
    %v794 = vadd.s32 %v793, 536870912
    %v795 = vshrl.u32 %v794, 30
    %v796 = vshll.u32 %v795, 30
    %v797 = vsub.s32 %v793, %v796
    %vm798 = vcmp.lt.s32.totalorder %v797, 0
    %v799 = vsub.s32 0, %v797
    %v800 = vsel %vm798, %v799, %v797
    %v801 = vclz %v800
    %v802 = vsub.s32 %v801, 2
    %vm803 = vcmp.gt.s32.totalorder 0, %v802
    %v804 = vsel %vm803, 0, %v802
    %v805 = vsub.s32 32, %v804
    %v806 = vshll.u32 %v797, %v804
    %v807 = vshrl.u32 %v789, %v805
    %v808 = vor.u32 %v806, %v807
    %v809 = vsub.s32 4294967266, %v804
    %v810 = vadd.s32 %v809, 127
    %v811 = vshll.u32 %v810, 23
    %v812 = vor.u32 4788187, %v811
    %v813 = vand.u32 2147483647, %v812
    %v815 = vcvt.s32.f32 %v808
    %v816 = vmul.f32 %v815, %v813
    %v817 = vxor.u32 %v816, 2147483648
    %v818 = vsel %vm697, %v817, %v816
    %v819 = vsub.s32 4, %v795
    %v820 = vsel %vm697, %v819, %v795
    %v821 = vsel %vm696, %v283, %v818
    %v822 = vsel %vm696, 0, %v820
    %v823 = vmul.f32 %v821, %v821
    %v824 = vmul.f32 %v823, -0.001358992
    %v825 = vadd.f32 %v824, 0.041655596
    %v826 = vmul.f32 %v823, %v825
    %v827 = vadd.f32 %v826, -0.4999988
    %v828 = vmul.f32 %v823, %v827
    %v829 = vadd.f32 1.0, %v828
    %v830 = vmul.f32 %v821, %v821
    %v831 = vmul.f32 %v830, -0.00019511016
    %v832 = vadd.f32 %v831, 0.008332121
    %v833 = vmul.f32 %v830, %v832
    %v834 = vadd.f32 %v833, -0.16666654
    %v835 = vmul.f32 %v830, %v834
    %v836 = vadd.f32 %v835, 1.0
    %v837 = vmul.f32 %v836, %v821
    %vm838 = vweird.f32 %v283
    %v839 = vadd.s32 %v822, 3
    %v840 = vand.u32 %v839, 3
    %vm841 = vcmp.lt.s32.totalorder %v840, 2
    %vm842 = vcmp.eq.s32.totalorder %v840, 0
    %v843 = vxor.u32 %v837, 2147483648
    %v844 = vsel %vm842, %v829, %v843
    %vm845 = vcmp.eq.s32.totalorder %v840, 2
    %v846 = vxor.u32 %v829, 2147483648
    %v847 = vsel %vm845, %v846, %v837
    %v848 = vsel %vm841, %v844, %v847
    %v849 = vsel %vm838, nan, %v848
    %v850 = vand.u32 2147483647, %v486
    %vm851 = vcmp.le.f32.partialorder %v850, 0.7853982
    %vm852 = vcmp.lt.s32.totalorder %v486, 0
    %v853 = vand.u32 %v486, 2139095040
    %v854 = vshrl.u32 %v853, 23
    %v855 = vsub.s32 %v854, 127
    %v856 = vand.u32 2147483647, %v486
    %v857 = vand.u32 %v856, 8388607
    %v858 = vor.u32 %v857, 8388608
    %v859 = vsub.s32 0, %v858
    %v860 = vadd.s32 %v855, 1
    %vm861 = vcmp.gt.s32.totalorder %v860, 0
    %v862 = vsel %vm861, %v860, 0
    %v863 = vshrl.u32 %v862, 5
    %v864 = vand.u32 %v862, 31
    %v865 = vsub.s32 32, %v864
    %v866 = vshrl.u32 683565275, %v865
    %v867 = vshll.u32 683565275, %v864
    %v868 = vshrl.u32 2475754826, %v865
    %v869 = vor.u32 %v867, %v868
    %v870 = vshll.u32 2475754826, %v864
    %v871 = vshrl.u32 2131351028, %v865
    %v872 = vor.u32 %v870, %v871
    %v873 = vshll.u32 2131351028, %v864
    %v874 = vshrl.u32 2102212464, %v865
    %v875 = vor.u32 %v873, %v874
    %v876 = vshll.u32 2102212464, %v864
    %v877 = vshrl.u32 920167782, %v865
    %v878 = vor.u32 %v876, %v877
    %v879 = vshll.u32 920167782, %v864
    %v880 = vshrl.u32 1326507024, %v865
    %v881 = vor.u32 %v879, %v880
    %vm882 = vcmp.lt.s32.totalorder %v863, 1
    %vm883 = vcmp.lt.s32.totalorder %v863, 2
    %vm884 = vcmp.lt.s32.totalorder %v863, 3
    %vm885 = vcmp.lt.s32.totalorder %v863, 4
    %v886 = vsel %vm882, %v866, %v869
    %v887 = vsel %vm885, %v875, 2102212464
    %v888 = vsel %vm884, %v872, %v887
    %v889 = vsel %vm883, %v886, %v888
    %v890 = vsel %vm882, %v869, %v872
    %v891 = vsel %vm885, %v878, 920167782
    %v892 = vsel %vm884, %v875, %v891
    %v893 = vsel %vm883, %v890, %v892
    %v894 = vsel %vm882, %v872, %v875
    %v895 = vsel %vm885, %v881, 1326507024
    %v896 = vsel %vm884, %v878, %v895
    %v897 = vsel %vm883, %v894, %v896
    %v898 = vshll.u32 %v858, 8
    %v899 = vand.u32 %v898, 65535
    %v900 = vshrl.u32 %v898, 16
    %v901 = vand.u32 %v897, 65535
    %v902 = vshrl.u32 %v897, 16
    %v903 = vmul.u32 %v899, %v901
    %v904 = vmul.u32 %v899, %v902
    %v905 = vmul.u32 %v900, %v901
    %v906 = vmul.u32 %v900, %v902
    %v907 = vshll.u32 %v904, 16
    %v908 = vshrl.u32 %v904, 16
    %v909 = vshll.u32 %v905, 16
    %v910 = vshrl.u32 %v905, 16
    %vm911 = vc.u32 %v903, %v907
    %v912 = vsel %vm911, 1, 0
    %v913 = vadd.s32 %v903, %v907
    %v914 = vadd.s32 %v906, %v912
    %vm915 = vc.u32 %v913, %v909
    %v916 = vsel %vm915, 1, 0
    %v917 = vadd.s32 %v913, %v909
    %v918 = vadd.s32 %v914, %v916
    %v919 = vadd.s32 %v918, %v908
    %v920 = vadd.s32 %v919, %v910
    %v921 = vand.u32 %v898, 65535
    %v922 = vshrl.u32 %v898, 16
    %v923 = vand.u32 %v893, 65535
    %v924 = vshrl.u32 %v893, 16
    %v925 = vmul.u32 %v921, %v923
    %v926 = vmul.u32 %v921, %v924
    %v927 = vmul.u32 %v922, %v923
    %v928 = vmul.u32 %v922, %v924
    %v929 = vshll.u32 %v926, 16
    %v930 = vshrl.u32 %v926, 16
    %v931 = vshll.u32 %v927, 16
    %v932 = vshrl.u32 %v927, 16
    %vm933 = vc.u32 %v925, %v929
    %v934 = vsel %vm933, 1, 0
    %v935 = vadd.s32 %v925, %v929
    %v936 = vadd.s32 %v928, %v934
    %vm937 = vc.u32 %v935, %v931
    %v938 = vsel %vm937, 1, 0
    %v939 = vadd.s32 %v935, %v931
    %v940 = vadd.s32 %v936, %v938
    %v941 = vadd.s32 %v940, %v930
    %v942 = vadd.s32 %v941, %v932
    %v943 = vmul.u32 %v898, %v889
    %v944 = vadd.s32 %v920, %v939
    %vm945 = vc.u32 %v920, %v939
    %v946 = vadd.s32 %v942, 1
    %v947 = vsel %vm945, %v946, %v942
    %v948 = vadd.s32 %v943, %v947
    %v949 = vadd.s32 %v948, 536870912
    %v950 = vshrl.u32 %v949, 30
    %v951 = vshll.u32 %v950, 30
    %v952 = vsub.s32 %v948, %v951
    %vm953 = vcmp.lt.s32.totalorder %v952, 0
    %v954 = vsub.s32 0, %v952
    %v955 = vsel %vm953, %v954, %v952
    %v956 = vclz %v955
    %v957 = vsub.s32 %v956, 2
    %vm958 = vcmp.gt.s32.totalorder 0, %v957
    %v959 = vsel %vm958, 0, %v957
    %v960 = vsub.s32 32, %v959
    %v961 = vshll.u32 %v952, %v959
    %v962 = vshrl.u32 %v944, %v960
    %v963 = vor.u32 %v961, %v962
    %v964 = vsub.s32 4294967266, %v959
    %v965 = vadd.s32 %v964, 127
    %v966 = vshll.u32 %v965, 23
    %v967 = vor.u32 4788187, %v966
    %v968 = vand.u32 2147483647, %v967
    %v970 = vcvt.s32.f32 %v963
    %v971 = vmul.f32 %v970, %v968
    %v972 = vxor.u32 %v971, 2147483648
    %v973 = vsel %vm852, %v972, %v971
    %v974 = vsub.s32 4, %v950
    %v975 = vsel %vm852, %v974, %v950
    %v976 = vsel %vm851, %v486, %v973
    %v977 = vsel %vm851, 0, %v975
    %v978 = vmul.f32 %v976, %v976
    %v979 = vmul.f32 %v978, -0.001358992
    %v980 = vadd.f32 %v979, 0.041655596
    %v981 = vmul.f32 %v978, %v980
    %v982 = vadd.f32 %v981, -0.4999988
    %v983 = vmul.f32 %v978, %v982
    %v984 = vadd.f32 1.0, %v983
    %v985 = vmul.f32 %v976, %v976
    %v986 = vmul.f32 %v985, -0.00019511016
    %v987 = vadd.f32 %v986, 0.008332121
    %v988 = vmul.f32 %v985, %v987
    %v989 = vadd.f32 %v988, -0.16666654
    %v990 = vmul.f32 %v985, %v989
    %v991 = vadd.f32 %v990, 1.0
    %v992 = vmul.f32 %v991, %v976
    %vm993 = vweird.f32 %v486
    %v994 = vadd.s32 %v977, 3
    %v995 = vand.u32 %v994, 3
    %vm996 = vcmp.lt.s32.totalorder %v995, 2
    %vm997 = vcmp.eq.s32.totalorder %v995, 0
    %v998 = vxor.u32 %v992, 2147483648
    %v999 = vsel %vm997, %v984, %v998
    %vm1000 = vcmp.eq.s32.totalorder %v995, 2
    %v1001 = vxor.u32 %v984, 2147483648
    %v1002 = vsel %vm1000, %v1001, %v992
    %v1003 = vsel %vm996, %v999, %v1002
    %v1004 = vsel %vm993, nan, %v1003
    %v1005 = vand.u32 2147483647, %v689
    %vm1006 = vcmp.le.f32.partialorder %v1005, 0.7853982
    %vm1007 = vcmp.lt.s32.totalorder %v689, 0
    %v1008 = vand.u32 %v689, 2139095040
    %v1009 = vshrl.u32 %v1008, 23
    %v1010 = vsub.s32 %v1009, 127
    %v1011 = vand.u32 2147483647, %v689
    %v1012 = vand.u32 %v1011, 8388607
    %v1013 = vor.u32 %v1012, 8388608
    %v1014 = vsub.s32 0, %v1013
    %v1015 = vadd.s32 %v1010, 1
    %vm1016 = vcmp.gt.s32.totalorder %v1015, 0
    %v1017 = vsel %vm1016, %v1015, 0
    %v1018 = vshrl.u32 %v1017, 5
    %v1019 = vand.u32 %v1017, 31
    %v1020 = vsub.s32 32, %v1019
    %v1021 = vshrl.u32 683565275, %v1020
    %v1022 = vshll.u32 683565275, %v1019
    %v1023 = vshrl.u32 2475754826, %v1020
    %v1024 = vor.u32 %v1022, %v1023
    %v1025 = vshll.u32 2475754826, %v1019
    %v1026 = vshrl.u32 2131351028, %v1020
    %v1027 = vor.u32 %v1025, %v1026
    %v1028 = vshll.u32 2131351028, %v1019
    %v1029 = vshrl.u32 2102212464, %v1020
    %v1030 = vor.u32 %v1028, %v1029
    %v1031 = vshll.u32 2102212464, %v1019
    %v1032 = vshrl.u32 920167782, %v1020
    %v1033 = vor.u32 %v1031, %v1032
    %v1034 = vshll.u32 920167782, %v1019
    %v1035 = vshrl.u32 1326507024, %v1020
    %v1036 = vor.u32 %v1034, %v1035
    %vm1037 = vcmp.lt.s32.totalorder %v1018, 1
    %vm1038 = vcmp.lt.s32.totalorder %v1018, 2
    %vm1039 = vcmp.lt.s32.totalorder %v1018, 3
    %vm1040 = vcmp.lt.s32.totalorder %v1018, 4
    %v1041 = vsel %vm1037, %v1021, %v1024
    %v1042 = vsel %vm1040, %v1030, 2102212464
    %v1043 = vsel %vm1039, %v1027, %v1042
    %v1044 = vsel %vm1038, %v1041, %v1043
    %v1045 = vsel %vm1037, %v1024, %v1027
    %v1046 = vsel %vm1040, %v1033, 920167782
    %v1047 = vsel %vm1039, %v1030, %v1046
    %v1048 = vsel %vm1038, %v1045, %v1047
    %v1049 = vsel %vm1037, %v1027, %v1030
    %v1050 = vsel %vm1040, %v1036, 1326507024
    %v1051 = vsel %vm1039, %v1033, %v1050
    %v1052 = vsel %vm1038, %v1049, %v1051
    %v1053 = vshll.u32 %v1013, 8
    %v1054 = vand.u32 %v1053, 65535
    %v1055 = vshrl.u32 %v1053, 16
    %v1056 = vand.u32 %v1052, 65535
    %v1057 = vshrl.u32 %v1052, 16
    %v1058 = vmul.u32 %v1054, %v1056
    %v1059 = vmul.u32 %v1054, %v1057
    %v1060 = vmul.u32 %v1055, %v1056
    %v1061 = vmul.u32 %v1055, %v1057
    %v1062 = vshll.u32 %v1059, 16
    %v1063 = vshrl.u32 %v1059, 16
    %v1064 = vshll.u32 %v1060, 16
    %v1065 = vshrl.u32 %v1060, 16
    %vm1066 = vc.u32 %v1058, %v1062
    %v1067 = vsel %vm1066, 1, 0
    %v1068 = vadd.s32 %v1058, %v1062
    %v1069 = vadd.s32 %v1061, %v1067
    %vm1070 = vc.u32 %v1068, %v1064
    %v1071 = vsel %vm1070, 1, 0
    %v1072 = vadd.s32 %v1068, %v1064
    %v1073 = vadd.s32 %v1069, %v1071
    %v1074 = vadd.s32 %v1073, %v1063
    %v1075 = vadd.s32 %v1074, %v1065
    %v1076 = vand.u32 %v1053, 65535
    %v1077 = vshrl.u32 %v1053, 16
    %v1078 = vand.u32 %v1048, 65535
    %v1079 = vshrl.u32 %v1048, 16
    %v1080 = vmul.u32 %v1076, %v1078
    %v1081 = vmul.u32 %v1076, %v1079
    %v1082 = vmul.u32 %v1077, %v1078
    %v1083 = vmul.u32 %v1077, %v1079
    %v1084 = vshll.u32 %v1081, 16
    %v1085 = vshrl.u32 %v1081, 16
    %v1086 = vshll.u32 %v1082, 16
    %v1087 = vshrl.u32 %v1082, 16
    %vm1088 = vc.u32 %v1080, %v1084
    %v1089 = vsel %vm1088, 1, 0
    %v1090 = vadd.s32 %v1080, %v1084
    %v1091 = vadd.s32 %v1083, %v1089
    %vm1092 = vc.u32 %v1090, %v1086
    %v1093 = vsel %vm1092, 1, 0
    %v1094 = vadd.s32 %v1090, %v1086
    %v1095 = vadd.s32 %v1091, %v1093
    %v1096 = vadd.s32 %v1095, %v1085
    %v1097 = vadd.s32 %v1096, %v1087
    %v1098 = vmul.u32 %v1053, %v1044
    %v1099 = vadd.s32 %v1075, %v1094
    %vm1100 = vc.u32 %v1075, %v1094
    %v1101 = vadd.s32 %v1097, 1
    %v1102 = vsel %vm1100, %v1101, %v1097
    %v1103 = vadd.s32 %v1098, %v1102
    %v1104 = vadd.s32 %v1103, 536870912
    %v1105 = vshrl.u32 %v1104, 30
    %v1106 = vshll.u32 %v1105, 30
    %v1107 = vsub.s32 %v1103, %v1106
    %vm1108 = vcmp.lt.s32.totalorder %v1107, 0
    %v1109 = vsub.s32 0, %v1107
    %v1110 = vsel %vm1108, %v1109, %v1107
    %v1111 = vclz %v1110
    %v1112 = vsub.s32 %v1111, 2
    %vm1113 = vcmp.gt.s32.totalorder 0, %v1112
    %v1114 = vsel %vm1113, 0, %v1112
    %v1115 = vsub.s32 32, %v1114
    %v1116 = vshll.u32 %v1107, %v1114
    %v1117 = vshrl.u32 %v1099, %v1115
    %v1118 = vor.u32 %v1116, %v1117
    %v1119 = vsub.s32 4294967266, %v1114
    %v1120 = vadd.s32 %v1119, 127
    %v1121 = vshll.u32 %v1120, 23
    %v1122 = vor.u32 4788187, %v1121
    %v1123 = vand.u32 2147483647, %v1122
    %v1125 = vcvt.s32.f32 %v1118
    %v1126 = vmul.f32 %v1125, %v1123
    %v1127 = vxor.u32 %v1126, 2147483648
    %v1128 = vsel %vm1007, %v1127, %v1126
    %v1129 = vsub.s32 4, %v1105
    %v1130 = vsel %vm1007, %v1129, %v1105
    %v1131 = vsel %vm1006, %v689, %v1128
    %v1132 = vsel %vm1006, 0, %v1130
    %v1133 = vmul.f32 %v1131, %v1131
    %v1134 = vmul.f32 %v1133, -0.001358992
    %v1135 = vadd.f32 %v1134, 0.041655596
    %v1136 = vmul.f32 %v1133, %v1135
    %v1137 = vadd.f32 %v1136, -0.4999988
    %v1138 = vmul.f32 %v1133, %v1137
    %v1139 = vadd.f32 1.0, %v1138
    %v1140 = vmul.f32 %v1131, %v1131
    %v1141 = vmul.f32 %v1140, -0.00019511016
    %v1142 = vadd.f32 %v1141, 0.008332121
    %v1143 = vmul.f32 %v1140, %v1142
    %v1144 = vadd.f32 %v1143, -0.16666654
    %v1145 = vmul.f32 %v1140, %v1144
    %v1146 = vadd.f32 %v1145, 1.0
    %v1147 = vmul.f32 %v1146, %v1131
    %vm1148 = vweird.f32 %v689
    %v1149 = vadd.s32 %v1132, 3
    %v1150 = vand.u32 %v1149, 3
    %vm1151 = vcmp.lt.s32.totalorder %v1150, 2
    %vm1152 = vcmp.eq.s32.totalorder %v1150, 0
    %v1153 = vxor.u32 %v1147, 2147483648
    %v1154 = vsel %vm1152, %v1139, %v1153
    %vm1155 = vcmp.eq.s32.totalorder %v1150, 2
    %v1156 = vxor.u32 %v1139, 2147483648
    %v1157 = vsel %vm1155, %v1156, %v1147
    %v1158 = vsel %vm1151, %v1154, %v1157
    %v1159 = vsel %vm1148, nan, %v1158
    %v1160 = vand.u32 2147483647, %v287
    %vm1161 = vcmp.le.f32.partialorder %v1160, 0.7853982
    %vm1162 = vcmp.lt.s32.totalorder %v287, 0
    %v1163 = vand.u32 %v287, 2139095040
    %v1164 = vshrl.u32 %v1163, 23
    %v1165 = vsub.s32 %v1164, 127
    %v1166 = vand.u32 2147483647, %v287
    %v1167 = vand.u32 %v1166, 8388607
    %v1168 = vor.u32 %v1167, 8388608
    %v1169 = vsub.s32 0, %v1168
    %v1170 = vadd.s32 %v1165, 1
    %vm1171 = vcmp.gt.s32.totalorder %v1170, 0
    %v1172 = vsel %vm1171, %v1170, 0
    %v1173 = vshrl.u32 %v1172, 5
    %v1174 = vand.u32 %v1172, 31
    %v1175 = vsub.s32 32, %v1174
    %v1176 = vshrl.u32 683565275, %v1175
    %v1177 = vshll.u32 683565275, %v1174
    %v1178 = vshrl.u32 2475754826, %v1175
    %v1179 = vor.u32 %v1177, %v1178
    %v1180 = vshll.u32 2475754826, %v1174
    %v1181 = vshrl.u32 2131351028, %v1175
    %v1182 = vor.u32 %v1180, %v1181
    %v1183 = vshll.u32 2131351028, %v1174
    %v1184 = vshrl.u32 2102212464, %v1175
    %v1185 = vor.u32 %v1183, %v1184
    %v1186 = vshll.u32 2102212464, %v1174
    %v1187 = vshrl.u32 920167782, %v1175
    %v1188 = vor.u32 %v1186, %v1187
    %v1189 = vshll.u32 920167782, %v1174
    %v1190 = vshrl.u32 1326507024, %v1175
    %v1191 = vor.u32 %v1189, %v1190
    %vm1192 = vcmp.lt.s32.totalorder %v1173, 1
    %vm1193 = vcmp.lt.s32.totalorder %v1173, 2
    %vm1194 = vcmp.lt.s32.totalorder %v1173, 3
    %vm1195 = vcmp.lt.s32.totalorder %v1173, 4
    %v1196 = vsel %vm1192, %v1176, %v1179
    %v1197 = vsel %vm1195, %v1185, 2102212464
    %v1198 = vsel %vm1194, %v1182, %v1197
    %v1199 = vsel %vm1193, %v1196, %v1198
    %v1200 = vsel %vm1192, %v1179, %v1182
    %v1201 = vsel %vm1195, %v1188, 920167782
    %v1202 = vsel %vm1194, %v1185, %v1201
    %v1203 = vsel %vm1193, %v1200, %v1202
    %v1204 = vsel %vm1192, %v1182, %v1185
    %v1205 = vsel %vm1195, %v1191, 1326507024
    %v1206 = vsel %vm1194, %v1188, %v1205
    %v1207 = vsel %vm1193, %v1204, %v1206
    %v1208 = vshll.u32 %v1168, 8
    %v1209 = vand.u32 %v1208, 65535
    %v1210 = vshrl.u32 %v1208, 16
    %v1211 = vand.u32 %v1207, 65535
    %v1212 = vshrl.u32 %v1207, 16
    %v1213 = vmul.u32 %v1209, %v1211
    %v1214 = vmul.u32 %v1209, %v1212
    %v1215 = vmul.u32 %v1210, %v1211
    %v1216 = vmul.u32 %v1210, %v1212
    %v1217 = vshll.u32 %v1214, 16
    %v1218 = vshrl.u32 %v1214, 16
    %v1219 = vshll.u32 %v1215, 16
    %v1220 = vshrl.u32 %v1215, 16
    %vm1221 = vc.u32 %v1213, %v1217
    %v1222 = vsel %vm1221, 1, 0
    %v1223 = vadd.s32 %v1213, %v1217
    %v1224 = vadd.s32 %v1216, %v1222
    %vm1225 = vc.u32 %v1223, %v1219
    %v1226 = vsel %vm1225, 1, 0
    %v1227 = vadd.s32 %v1223, %v1219
    %v1228 = vadd.s32 %v1224, %v1226
    %v1229 = vadd.s32 %v1228, %v1218
    %v1230 = vadd.s32 %v1229, %v1220
    %v1231 = vand.u32 %v1208, 65535
    %v1232 = vshrl.u32 %v1208, 16
    %v1233 = vand.u32 %v1203, 65535
    %v1234 = vshrl.u32 %v1203, 16
    %v1235 = vmul.u32 %v1231, %v1233
    %v1236 = vmul.u32 %v1231, %v1234
    %v1237 = vmul.u32 %v1232, %v1233
    %v1238 = vmul.u32 %v1232, %v1234
    %v1239 = vshll.u32 %v1236, 16
    %v1240 = vshrl.u32 %v1236, 16
    %v1241 = vshll.u32 %v1237, 16
    %v1242 = vshrl.u32 %v1237, 16
    %vm1243 = vc.u32 %v1235, %v1239
    %v1244 = vsel %vm1243, 1, 0
    %v1245 = vadd.s32 %v1235, %v1239
    %v1246 = vadd.s32 %v1238, %v1244
    %vm1247 = vc.u32 %v1245, %v1241
    %v1248 = vsel %vm1247, 1, 0
    %v1249 = vadd.s32 %v1245, %v1241
    %v1250 = vadd.s32 %v1246, %v1248
    %v1251 = vadd.s32 %v1250, %v1240
    %v1252 = vadd.s32 %v1251, %v1242
    %v1253 = vmul.u32 %v1208, %v1199
    %v1254 = vadd.s32 %v1230, %v1249
    %vm1255 = vc.u32 %v1230, %v1249
    %v1256 = vadd.s32 %v1252, 1
    %v1257 = vsel %vm1255, %v1256, %v1252
    %v1258 = vadd.s32 %v1253, %v1257
    %v1259 = vadd.s32 %v1258, 536870912
    %v1260 = vshrl.u32 %v1259, 30
    %v1261 = vshll.u32 %v1260, 30
    %v1262 = vsub.s32 %v1258, %v1261
    %vm1263 = vcmp.lt.s32.totalorder %v1262, 0
    %v1264 = vsub.s32 0, %v1262
    %v1265 = vsel %vm1263, %v1264, %v1262
    %v1266 = vclz %v1265
    %v1267 = vsub.s32 %v1266, 2
    %vm1268 = vcmp.gt.s32.totalorder 0, %v1267
    %v1269 = vsel %vm1268, 0, %v1267
    %v1270 = vsub.s32 32, %v1269
    %v1271 = vshll.u32 %v1262, %v1269
    %v1272 = vshrl.u32 %v1254, %v1270
    %v1273 = vor.u32 %v1271, %v1272
    %v1274 = vsub.s32 4294967266, %v1269
    %v1275 = vadd.s32 %v1274, 127
    %v1276 = vshll.u32 %v1275, 23
    %v1277 = vor.u32 4788187, %v1276
    %v1278 = vand.u32 2147483647, %v1277
    %v1280 = vcvt.s32.f32 %v1273
    %v1281 = vmul.f32 %v1280, %v1278
    %v1282 = vxor.u32 %v1281, 2147483648
    %v1283 = vsel %vm1162, %v1282, %v1281
    %v1284 = vsub.s32 4, %v1260
    %v1285 = vsel %vm1162, %v1284, %v1260
    %v1286 = vsel %vm1161, %v287, %v1283
    %v1287 = vsel %vm1161, 0, %v1285
    %v1288 = vmul.f32 %v1286, %v1286
    %v1289 = vmul.f32 %v1288, -0.001358992
    %v1290 = vadd.f32 %v1289, 0.041655596
    %v1291 = vmul.f32 %v1288, %v1290
    %v1292 = vadd.f32 %v1291, -0.4999988
    %v1293 = vmul.f32 %v1288, %v1292
    %v1294 = vadd.f32 1.0, %v1293
    %v1295 = vmul.f32 %v1286, %v1286
    %v1296 = vmul.f32 %v1295, -0.00019511016
    %v1297 = vadd.f32 %v1296, 0.008332121
    %v1298 = vmul.f32 %v1295, %v1297
    %v1299 = vadd.f32 %v1298, -0.16666654
    %v1300 = vmul.f32 %v1295, %v1299
    %v1301 = vadd.f32 %v1300, 1.0
    %v1302 = vmul.f32 %v1301, %v1286
    %vm1303 = vweird.f32 %v287
    %v1304 = vadd.s32 %v1287, 3
    %v1305 = vand.u32 %v1304, 3
    %vm1306 = vcmp.lt.s32.totalorder %v1305, 2
    %vm1307 = vcmp.eq.s32.totalorder %v1305, 0
    %v1308 = vxor.u32 %v1302, 2147483648
    %v1309 = vsel %vm1307, %v1294, %v1308
    %vm1310 = vcmp.eq.s32.totalorder %v1305, 2
    %v1311 = vxor.u32 %v1294, 2147483648
    %v1312 = vsel %vm1310, %v1311, %v1302
    %v1313 = vsel %vm1306, %v1309, %v1312
    %v1314 = vsel %vm1303, nan, %v1313
    %v1315 = vand.u32 2147483647, %v490
    %vm1316 = vcmp.le.f32.partialorder %v1315, 0.7853982
    %vm1317 = vcmp.lt.s32.totalorder %v490, 0
    %v1318 = vand.u32 %v490, 2139095040
    %v1319 = vshrl.u32 %v1318, 23
    %v1320 = vsub.s32 %v1319, 127
    %v1321 = vand.u32 2147483647, %v490
    %v1322 = vand.u32 %v1321, 8388607
    %v1323 = vor.u32 %v1322, 8388608
    %v1324 = vsub.s32 0, %v1323
    %v1325 = vadd.s32 %v1320, 1
    %vm1326 = vcmp.gt.s32.totalorder %v1325, 0
    %v1327 = vsel %vm1326, %v1325, 0
    %v1328 = vshrl.u32 %v1327, 5
    %v1329 = vand.u32 %v1327, 31
    %v1330 = vsub.s32 32, %v1329
    %v1331 = vshrl.u32 683565275, %v1330
    %v1332 = vshll.u32 683565275, %v1329
    %v1333 = vshrl.u32 2475754826, %v1330
    %v1334 = vor.u32 %v1332, %v1333
    %v1335 = vshll.u32 2475754826, %v1329
    %v1336 = vshrl.u32 2131351028, %v1330
    %v1337 = vor.u32 %v1335, %v1336
    %v1338 = vshll.u32 2131351028, %v1329
    %v1339 = vshrl.u32 2102212464, %v1330
    %v1340 = vor.u32 %v1338, %v1339
    %v1341 = vshll.u32 2102212464, %v1329
    %v1342 = vshrl.u32 920167782, %v1330
    %v1343 = vor.u32 %v1341, %v1342
    %v1344 = vshll.u32 920167782, %v1329
    %v1345 = vshrl.u32 1326507024, %v1330
    %v1346 = vor.u32 %v1344, %v1345
    %vm1347 = vcmp.lt.s32.totalorder %v1328, 1
    %vm1348 = vcmp.lt.s32.totalorder %v1328, 2
    %vm1349 = vcmp.lt.s32.totalorder %v1328, 3
    %vm1350 = vcmp.lt.s32.totalorder %v1328, 4
    %v1351 = vsel %vm1347, %v1331, %v1334
    %v1352 = vsel %vm1350, %v1340, 2102212464
    %v1353 = vsel %vm1349, %v1337, %v1352
    %v1354 = vsel %vm1348, %v1351, %v1353
    %v1355 = vsel %vm1347, %v1334, %v1337
    %v1356 = vsel %vm1350, %v1343, 920167782
    %v1357 = vsel %vm1349, %v1340, %v1356
    %v1358 = vsel %vm1348, %v1355, %v1357
    %v1359 = vsel %vm1347, %v1337, %v1340
    %v1360 = vsel %vm1350, %v1346, 1326507024
    %v1361 = vsel %vm1349, %v1343, %v1360
    %v1362 = vsel %vm1348, %v1359, %v1361
    %v1363 = vshll.u32 %v1323, 8
    %v1364 = vand.u32 %v1363, 65535
    %v1365 = vshrl.u32 %v1363, 16
    %v1366 = vand.u32 %v1362, 65535
    %v1367 = vshrl.u32 %v1362, 16
    %v1368 = vmul.u32 %v1364, %v1366
    %v1369 = vmul.u32 %v1364, %v1367
    %v1370 = vmul.u32 %v1365, %v1366
    %v1371 = vmul.u32 %v1365, %v1367
    %v1372 = vshll.u32 %v1369, 16
    %v1373 = vshrl.u32 %v1369, 16
    %v1374 = vshll.u32 %v1370, 16
    %v1375 = vshrl.u32 %v1370, 16
    %vm1376 = vc.u32 %v1368, %v1372
    %v1377 = vsel %vm1376, 1, 0
    %v1378 = vadd.s32 %v1368, %v1372
    %v1379 = vadd.s32 %v1371, %v1377
    %vm1380 = vc.u32 %v1378, %v1374
    %v1381 = vsel %vm1380, 1, 0
    %v1382 = vadd.s32 %v1378, %v1374
    %v1383 = vadd.s32 %v1379, %v1381
    %v1384 = vadd.s32 %v1383, %v1373
    %v1385 = vadd.s32 %v1384, %v1375
    %v1386 = vand.u32 %v1363, 65535
    %v1387 = vshrl.u32 %v1363, 16
    %v1388 = vand.u32 %v1358, 65535
    %v1389 = vshrl.u32 %v1358, 16
    %v1390 = vmul.u32 %v1386, %v1388
    %v1391 = vmul.u32 %v1386, %v1389
    %v1392 = vmul.u32 %v1387, %v1388
    %v1393 = vmul.u32 %v1387, %v1389
    %v1394 = vshll.u32 %v1391, 16
    %v1395 = vshrl.u32 %v1391, 16
    %v1396 = vshll.u32 %v1392, 16
    %v1397 = vshrl.u32 %v1392, 16
    %vm1398 = vc.u32 %v1390, %v1394
    %v1399 = vsel %vm1398, 1, 0
    %v1400 = vadd.s32 %v1390, %v1394
    %v1401 = vadd.s32 %v1393, %v1399
    %vm1402 = vc.u32 %v1400, %v1396
    %v1403 = vsel %vm1402, 1, 0
    %v1404 = vadd.s32 %v1400, %v1396
    %v1405 = vadd.s32 %v1401, %v1403
    %v1406 = vadd.s32 %v1405, %v1395
    %v1407 = vadd.s32 %v1406, %v1397
    %v1408 = vmul.u32 %v1363, %v1354
    %v1409 = vadd.s32 %v1385, %v1404
    %vm1410 = vc.u32 %v1385, %v1404
    %v1411 = vadd.s32 %v1407, 1
    %v1412 = vsel %vm1410, %v1411, %v1407
    %v1413 = vadd.s32 %v1408, %v1412
    %v1414 = vadd.s32 %v1413, 536870912
    %v1415 = vshrl.u32 %v1414, 30
    %v1416 = vshll.u32 %v1415, 30
    %v1417 = vsub.s32 %v1413, %v1416
    %vm1418 = vcmp.lt.s32.totalorder %v1417, 0
    %v1419 = vsub.s32 0, %v1417
    %v1420 = vsel %vm1418, %v1419, %v1417
    %v1421 = vclz %v1420
    %v1422 = vsub.s32 %v1421, 2
    %vm1423 = vcmp.gt.s32.totalorder 0, %v1422
    %v1424 = vsel %vm1423, 0, %v1422
    %v1425 = vsub.s32 32, %v1424
    %v1426 = vshll.u32 %v1417, %v1424
    %v1427 = vshrl.u32 %v1409, %v1425
    %v1428 = vor.u32 %v1426, %v1427
    %v1429 = vsub.s32 4294967266, %v1424
    %v1430 = vadd.s32 %v1429, 127
    %v1431 = vshll.u32 %v1430, 23
    %v1432 = vor.u32 4788187, %v1431
    %v1433 = vand.u32 2147483647, %v1432
    %v1435 = vcvt.s32.f32 %v1428
    %v1436 = vmul.f32 %v1435, %v1433
    %v1437 = vxor.u32 %v1436, 2147483648
    %v1438 = vsel %vm1317, %v1437, %v1436
    %v1439 = vsub.s32 4, %v1415
    %v1440 = vsel %vm1317, %v1439, %v1415
    %v1441 = vsel %vm1316, %v490, %v1438
    %v1442 = vsel %vm1316, 0, %v1440
    %v1443 = vmul.f32 %v1441, %v1441
    %v1444 = vmul.f32 %v1443, -0.001358992
    %v1445 = vadd.f32 %v1444, 0.041655596
    %v1446 = vmul.f32 %v1443, %v1445
    %v1447 = vadd.f32 %v1446, -0.4999988
    %v1448 = vmul.f32 %v1443, %v1447
    %v1449 = vadd.f32 1.0, %v1448
    %v1450 = vmul.f32 %v1441, %v1441
    %v1451 = vmul.f32 %v1450, -0.00019511016
    %v1452 = vadd.f32 %v1451, 0.008332121
    %v1453 = vmul.f32 %v1450, %v1452
    %v1454 = vadd.f32 %v1453, -0.16666654
    %v1455 = vmul.f32 %v1450, %v1454
    %v1456 = vadd.f32 %v1455, 1.0
    %v1457 = vmul.f32 %v1456, %v1441
    %vm1458 = vweird.f32 %v490
    %v1459 = vadd.s32 %v1442, 3
    %v1460 = vand.u32 %v1459, 3
    %vm1461 = vcmp.lt.s32.totalorder %v1460, 2
    %vm1462 = vcmp.eq.s32.totalorder %v1460, 0
    %v1463 = vxor.u32 %v1457, 2147483648
    %v1464 = vsel %vm1462, %v1449, %v1463
    %vm1465 = vcmp.eq.s32.totalorder %v1460, 2
    %v1466 = vxor.u32 %v1449, 2147483648
    %v1467 = vsel %vm1465, %v1466, %v1457
    %v1468 = vsel %vm1461, %v1464, %v1467
    %v1469 = vsel %vm1458, nan, %v1468
    %v1470 = vand.u32 2147483647, %v693
    %vm1471 = vcmp.le.f32.partialorder %v1470, 0.7853982
    %vm1472 = vcmp.lt.s32.totalorder %v693, 0
    %v1473 = vand.u32 %v693, 2139095040
    %v1474 = vshrl.u32 %v1473, 23
    %v1475 = vsub.s32 %v1474, 127
    %v1476 = vand.u32 2147483647, %v693
    %v1477 = vand.u32 %v1476, 8388607
    %v1478 = vor.u32 %v1477, 8388608
    %v1479 = vsub.s32 0, %v1478
    %v1480 = vadd.s32 %v1475, 1
    %vm1481 = vcmp.gt.s32.totalorder %v1480, 0
    %v1482 = vsel %vm1481, %v1480, 0
    %v1483 = vshrl.u32 %v1482, 5
    %v1484 = vand.u32 %v1482, 31
    %v1485 = vsub.s32 32, %v1484
    %v1486 = vshrl.u32 683565275, %v1485
    %v1487 = vshll.u32 683565275, %v1484
    %v1488 = vshrl.u32 2475754826, %v1485
    %v1489 = vor.u32 %v1487, %v1488
    %v1490 = vshll.u32 2475754826, %v1484
    %v1491 = vshrl.u32 2131351028, %v1485
    %v1492 = vor.u32 %v1490, %v1491
    %v1493 = vshll.u32 2131351028, %v1484
    %v1494 = vshrl.u32 2102212464, %v1485
    %v1495 = vor.u32 %v1493, %v1494
    %v1496 = vshll.u32 2102212464, %v1484
    %v1497 = vshrl.u32 920167782, %v1485
    %v1498 = vor.u32 %v1496, %v1497
    %v1499 = vshll.u32 920167782, %v1484
    %v1500 = vshrl.u32 1326507024, %v1485
    %v1501 = vor.u32 %v1499, %v1500
    %vm1502 = vcmp.lt.s32.totalorder %v1483, 1
    %vm1503 = vcmp.lt.s32.totalorder %v1483, 2
    %vm1504 = vcmp.lt.s32.totalorder %v1483, 3
    %vm1505 = vcmp.lt.s32.totalorder %v1483, 4
    %v1506 = vsel %vm1502, %v1486, %v1489
    %v1507 = vsel %vm1505, %v1495, 2102212464
    %v1508 = vsel %vm1504, %v1492, %v1507
    %v1509 = vsel %vm1503, %v1506, %v1508
    %v1510 = vsel %vm1502, %v1489, %v1492
    %v1511 = vsel %vm1505, %v1498, 920167782
    %v1512 = vsel %vm1504, %v1495, %v1511
    %v1513 = vsel %vm1503, %v1510, %v1512
    %v1514 = vsel %vm1502, %v1492, %v1495
    %v1515 = vsel %vm1505, %v1501, 1326507024
    %v1516 = vsel %vm1504, %v1498, %v1515
    %v1517 = vsel %vm1503, %v1514, %v1516
    %v1518 = vshll.u32 %v1478, 8
    %v1519 = vand.u32 %v1518, 65535
    %v1520 = vshrl.u32 %v1518, 16
    %v1521 = vand.u32 %v1517, 65535
    %v1522 = vshrl.u32 %v1517, 16
    %v1523 = vmul.u32 %v1519, %v1521
    %v1524 = vmul.u32 %v1519, %v1522
    %v1525 = vmul.u32 %v1520, %v1521
    %v1526 = vmul.u32 %v1520, %v1522
    %v1527 = vshll.u32 %v1524, 16
    %v1528 = vshrl.u32 %v1524, 16
    %v1529 = vshll.u32 %v1525, 16
    %v1530 = vshrl.u32 %v1525, 16
    %vm1531 = vc.u32 %v1523, %v1527
    %v1532 = vsel %vm1531, 1, 0
    %v1533 = vadd.s32 %v1523, %v1527
    %v1534 = vadd.s32 %v1526, %v1532
    %vm1535 = vc.u32 %v1533, %v1529
    %v1536 = vsel %vm1535, 1, 0
    %v1537 = vadd.s32 %v1533, %v1529
    %v1538 = vadd.s32 %v1534, %v1536
    %v1539 = vadd.s32 %v1538, %v1528
    %v1540 = vadd.s32 %v1539, %v1530
    %v1541 = vand.u32 %v1518, 65535
    %v1542 = vshrl.u32 %v1518, 16
    %v1543 = vand.u32 %v1513, 65535
    %v1544 = vshrl.u32 %v1513, 16
    %v1545 = vmul.u32 %v1541, %v1543
    %v1546 = vmul.u32 %v1541, %v1544
    %v1547 = vmul.u32 %v1542, %v1543
    %v1548 = vmul.u32 %v1542, %v1544
    %v1549 = vshll.u32 %v1546, 16
    %v1550 = vshrl.u32 %v1546, 16
    %v1551 = vshll.u32 %v1547, 16
    %v1552 = vshrl.u32 %v1547, 16
    %vm1553 = vc.u32 %v1545, %v1549
    %v1554 = vsel %vm1553, 1, 0
    %v1555 = vadd.s32 %v1545, %v1549
    %v1556 = vadd.s32 %v1548, %v1554
    %vm1557 = vc.u32 %v1555, %v1551
    %v1558 = vsel %vm1557, 1, 0
    %v1559 = vadd.s32 %v1555, %v1551
    %v1560 = vadd.s32 %v1556, %v1558
    %v1561 = vadd.s32 %v1560, %v1550
    %v1562 = vadd.s32 %v1561, %v1552
    %v1563 = vmul.u32 %v1518, %v1509
    %v1564 = vadd.s32 %v1540, %v1559
    %vm1565 = vc.u32 %v1540, %v1559
    %v1566 = vadd.s32 %v1562, 1
    %v1567 = vsel %vm1565, %v1566, %v1562
    %v1568 = vadd.s32 %v1563, %v1567
    %v1569 = vadd.s32 %v1568, 536870912
    %v1570 = vshrl.u32 %v1569, 30
    %v1571 = vshll.u32 %v1570, 30
    %v1572 = vsub.s32 %v1568, %v1571
    %vm1573 = vcmp.lt.s32.totalorder %v1572, 0
    %v1574 = vsub.s32 0, %v1572
    %v1575 = vsel %vm1573, %v1574, %v1572
    %v1576 = vclz %v1575
    %v1577 = vsub.s32 %v1576, 2
    %vm1578 = vcmp.gt.s32.totalorder 0, %v1577
    %v1579 = vsel %vm1578, 0, %v1577
    %v1580 = vsub.s32 32, %v1579
    %v1581 = vshll.u32 %v1572, %v1579
    %v1582 = vshrl.u32 %v1564, %v1580
    %v1583 = vor.u32 %v1581, %v1582
    %v1584 = vsub.s32 4294967266, %v1579
    %v1585 = vadd.s32 %v1584, 127
    %v1586 = vshll.u32 %v1585, 23
    %v1587 = vor.u32 4788187, %v1586
    %v1588 = vand.u32 2147483647, %v1587
    %v1590 = vcvt.s32.f32 %v1583
    %v1591 = vmul.f32 %v1590, %v1588
    %v1592 = vxor.u32 %v1591, 2147483648
    %v1593 = vsel %vm1472, %v1592, %v1591
    %v1594 = vsub.s32 4, %v1570
    %v1595 = vsel %vm1472, %v1594, %v1570
    %v1596 = vsel %vm1471, %v693, %v1593
    %v1597 = vsel %vm1471, 0, %v1595
    %v1598 = vmul.f32 %v1596, %v1596
    %v1599 = vmul.f32 %v1598, -0.001358992
    %v1600 = vadd.f32 %v1599, 0.041655596
    %v1601 = vmul.f32 %v1598, %v1600
    %v1602 = vadd.f32 %v1601, -0.4999988
    %v1603 = vmul.f32 %v1598, %v1602
    %v1604 = vadd.f32 1.0, %v1603
    %v1605 = vmul.f32 %v1596, %v1596
    %v1606 = vmul.f32 %v1605, -0.00019511016
    %v1607 = vadd.f32 %v1606, 0.008332121
    %v1608 = vmul.f32 %v1605, %v1607
    %v1609 = vadd.f32 %v1608, -0.16666654
    %v1610 = vmul.f32 %v1605, %v1609
    %v1611 = vadd.f32 %v1610, 1.0
    %v1612 = vmul.f32 %v1611, %v1596
    %vm1613 = vweird.f32 %v693
    %v1614 = vadd.s32 %v1597, 3
    %v1615 = vand.u32 %v1614, 3
    %vm1616 = vcmp.lt.s32.totalorder %v1615, 2
    %vm1617 = vcmp.eq.s32.totalorder %v1615, 0
    %v1618 = vxor.u32 %v1612, 2147483648
    %v1619 = vsel %vm1617, %v1604, %v1618
    %vm1620 = vcmp.eq.s32.totalorder %v1615, 2
    %v1621 = vxor.u32 %v1604, 2147483648
    %v1622 = vsel %vm1620, %v1621, %v1612
    %v1623 = vsel %vm1616, %v1619, %v1622
    %v1624 = vsel %vm1613, nan, %v1623
    %1625 = vst [vmem:[#allocation8] sm:$0xff] %v849
    %1626 = vst [vmem:[#allocation8 + $0x8] sm:$0xff] %v1004
    %1627 = vst [vmem:[#allocation8 + $0x10] sm:$0xff] %v1159
    %1628 = vst [vmem:[#allocation8 + $0x18] sm:$0xff] %v1314
    %1629 = vst [vmem:[#allocation8 + $0x20] sm:$0xff] %v1469
    %1630 = vst [vmem:[#allocation8 + $0x28] sm:$0xff] %v1624
    // Predicated region
    $region26: #{tpu_custom_call.1} parent=1 // pred_check
      _
    $region27: #{tpu_custom_call.1} parent=1 // pred_check_branch
      %1632 = sbr.rel (0) target = $region29
    $region28: #{tpu_custom_call.1} parent=1 // pred_region
      %1634 = vsyncadd [#allocation4], 0
      %s1635 = sshll.u32 [#allocation8], 4
      %s1636 = int_to_ptr.vmem [resolvable:$true] %s1635
      %s1637 = sshll.u32 %s3, 4
      %s1638 = int_to_ptr.hbm [resolvable:$true] %s1637
      %1643 = dma.vmem_to_hbm [thread:$0]  %s1636, 768, %s1638, [#allocation4], 384, 384, 24
    $region29: #{tpu_custom_call.1} parent=1 // pred_fallthru
      _
    // Predicated region
    $region30: #{tpu_custom_call.1} parent=1 // pred_check
      _
    $region31: #{tpu_custom_call.1} parent=1 // pred_check_branch
      %1645 = sbr.rel (0) target = $region33
    $region32: #{tpu_custom_call.1} parent=1 // pred_region
      %1647 = dma.done [#allocation4], 768
    $region33: #{tpu_custom_call.1} parent=1 // pred_fallthru
      _
    %1648 = vsyncpa [#allocation3], 1
    %1649 = vsyncpa [#allocation6], 1
    %1650 = vsyncpa [#allocation4], 1

</llo_original>
